<compile_context>
chip_gen: v7x
topology: tpu7x:2x2x1
jax: 0.10.0
libtpu: 0.0.40
codegen_flags: <defaults>
</compile_context>

<pallas_src>
import functools

import jax
import jax.numpy as jnp
from jax import lax
from jax.experimental import pallas as pl
from jax.experimental.pallas import tpu as pltpu


def _round_up(x, m):
    return ((x + m - 1) // m) * m


def _const_spec(arr):
    nd = arr.ndim
    return pl.BlockSpec(arr.shape, lambda b, _nd=nd: (0,) * _nd)


def make_vmask_cnn_kernel(Bt, Sp, S, E, NW, NC, Tout, maxf, compute_dtype):
    """One grid step == one batch tile of Bt examples; the whole forward is fused.

    Shapes (per tile): x (Bt*Sp, E); W_all (E, NC) with NC = maxf*NW, NW = nf*K and
    column layout c = shift*NW + filter*K + channel (zero columns for shift >= f).
    """

    def kernel(x_ref, w1_ref, b1_ref, w2_ref, b2_ref, wall_ref, bconv_ref,
               pmask_ref, wfc_ref, bfc_ref, logits_ref, infor_ref):
        x = x_ref[...]                                        # (Bt*Sp, E) compute dtype

        # ---- VMASK statistics MLP (f32 accumulation on the MXU) ----
        h = jnp.tanh(
            jnp.dot(x, w1_ref[...], preferred_element_type=jnp.float32) + b1_ref[...]
        )                                                     # (M, H) f32
        p = (
            jnp.dot(h.astype(compute_dtype), w2_ref[...],
                    preferred_element_type=jnp.float32)
            + b2_ref[...]
        )                                                     # (M, 2) f32

        # ---- softmax over 2 classes == sigmoid of the logit difference (EUP tanh) ----
        d = p[:, 1:2] - p[:, 0:1]                             # (M, 1)
        pos = 0.5 * (jnp.tanh(0.5 * d) + 1.0)                 # == softmax(p)[..., 1]
        neg = 1.0 - pos

        # ---- infor_loss per example (mask padded sequence positions) ----
        q = pos * jnp.log(pos + 1e-8) + neg * jnp.log(neg + 1e-8)   # (M, 1)
        q2 = q.reshape(Bt, Sp)
        if Sp > S:
            smask = lax.broadcasted_iota(jnp.int32, (1, Sp), 1) < S
            q2 = jnp.where(smask, q2, 0.0)
        infor_ref[...] = jnp.sum(q2, axis=1, keepdims=True)         # (Bt, 1)

        # ---- eval-path masking: x' = x * softmax(p)[..., 1:2] ----
        xp = (x.astype(jnp.float32) * pos).astype(compute_dtype)    # (M, E)

        # ---- CNN: one lane-dense matmul, then maxf-1 shifted adds of 24-wide slabs ----
        y = jnp.dot(xp, wall_ref[...], preferred_element_type=jnp.float32)  # (M, NC)
        y3 = y.reshape(Bt, Sp, NC)                  # layout-preserving (Sp % 8 == 0)
        conv = y3[:, 0:Tout, 0:NW]
        for i in range(1, maxf):
            conv = conv + y3[:, i:i + Tout, i * NW:(i + 1) * NW]
        conv = conv + bconv_ref[...].reshape(1, 1, NW)               # (Bt, Tout, NW)

        # relu >= 0, so zeroing invalid t positions never corrupts the max-pool.
        r = jnp.maximum(conv, 0.0) * pmask_ref[...]                  # (Bt, Tout, NW)
        feat = jnp.max(r, axis=1)                                    # (Bt, NW)

        # ---- final linear (dropout identity in eval) ----
        logits = (
            jnp.dot(feat.astype(compute_dtype), wfc_ref[...],
                    preferred_element_type=jnp.float32)
            + bfc_ref[...]
        )                                                            # (Bt, C)
        logits_ref[...] = logits

    return kernel


@functools.partial(
    jax.jit, static_argnames=("kernel_sizes", "batch_tile", "compute_dtype")
)
def vmask_cnn_forward(tokens, params, *, kernel_sizes, batch_tile=256,
                      compute_dtype=jnp.bfloat16):
    kernel_sizes = tuple(kernel_sizes)
    nf = len(kernel_sizes)
    maxf, minf = max(kernel_sizes), min(kernel_sizes)

    B, S = tokens.shape
    E = params["emb"].shape[1]
    K = params["bconv"][0].shape[1]
    C = params["bfc"].shape[1]
    assert S >= maxf, "sequence shorter than the largest conv filter"

    NW = nf * K                      # concatenated feature width
    NC = maxf * NW                   # combined conv-matmul output width
    Tout = S - minf + 1              # covers every filter's output length
    Sp = _round_up(S + maxf - minf, 8)   # sublane-aligned padded sequence length

    # Batch tiling: Bt examples per grid step, Bt always a multiple of 8.
    Bt = _round_up(min(batch_tile, _round_up(B, 8)), 8)
    num_tiles = -(-B // Bt)
    Bp = num_tiles * Bt

    # Embedding gather stays in XLA glue (see TODO at the top); emit it directly in the
    # compute dtype so the HBM round trip of the (B,S,E) activations is halved for bf16.
    x = jnp.take(params["emb"].astype(compute_dtype), tokens, axis=0)   # (B, S, E)
    x = jnp.pad(x, ((0, Bp - B), (0, Sp - S), (0, 0)))                  # zero pad
    x_flat = x.reshape(Bp * Sp, E)   # flatten in the wrapper -> aligned kernel layout

    # Weights in compute dtype for the MXU; biases stay f32 (added to f32 accumulators).
    w1 = params["w1"].astype(compute_dtype)                             # (E, H)
    w2 = params["w2"].astype(compute_dtype)                             # (H, 2)
    wfc = params["wfc"].astype(compute_dtype)                           # (NW, C)
    b1 = params["b1"].astype(jnp.float32)
    b2 = params["b2"].astype(jnp.float32)
    bfc = params["bfc"].astype(jnp.float32)

    # Combined conv weight (E, NC): column c = shift*NW + filter*K + channel,
    # zero columns where shift >= filter size.
    cols = []
    for i in range(maxf):
        blocks = []
        for idx, f in enumerate(kernel_sizes):
            if i < f:
                wr = params["wconv"][idx].reshape(f, E, K)
                blocks.append(wr[i].astype(jnp.float32))                # (E, K)
            else:
                blocks.append(jnp.zeros((E, K), jnp.float32))
        cols.append(jnp.concatenate(blocks, axis=1))                    # (E, NW)
    wall = jnp.concatenate(cols, axis=1).astype(compute_dtype)          # (E, NC)

    bconv_all = jnp.concatenate(
        [params["bconv"][i].astype(jnp.float32) for i in range(nf)], axis=1
    )                                                                   # (1, NW)

    # Max-pool validity mask: position t valid for filter f iff t < S - f + 1.
    limits = jnp.asarray(
        sum([[S - f + 1] * K for f in kernel_sizes], []), jnp.int32
    )                                                                   # (NW,)
    pmask = (jnp.arange(Tout, dtype=jnp.int32)[:, None] < limits[None, :])
    pmask = pmask.astype(jnp.float32)[None]                             # (1, Tout, NW)

    kernel = make_vmask_cnn_kernel(Bt, Sp, S, E, NW, NC, Tout, maxf, compute_dtype)

    inputs = [x_flat, w1, b1, w2, b2, wall, bconv_all, pmask, wfc, bfc]
    in_specs = [pl.BlockSpec((Bt * Sp, E), lambda b: (b, 0))]
    in_specs += [_const_spec(a) for a in inputs[1:]]

    out_shape = (
        jax.ShapeDtypeStruct((Bp, C), jnp.float32),   # logits (padded batch)
        jax.ShapeDtypeStruct((Bp, 1), jnp.float32),   # per-example infor partial sums
    )
    out_specs = (
        pl.BlockSpec((Bt, C), lambda b: (b, 0)),
        pl.BlockSpec((Bt, 1), lambda b: (b, 0)),
    )

    logits_padded, infor_partials = pl.pallas_call(
        kernel,
        out_shape=out_shape,
        grid_spec=pltpu.PrefetchScalarGridSpec(
            num_scalar_prefetch=0,
            grid=(num_tiles,),
            in_specs=in_specs,
            out_specs=out_specs,
        ),
        compiler_params=pltpu.CompilerParams(
            # Independent batch tiles -> shard across both TensorCores on v7x.
            dimension_semantics=("parallel",),
            # Covers these dims on every generation (raises v5e's 16 MiB default).
            # Re-derive Bt against 64 MiB VMEM on v7x for large E/S configs.
            vmem_limit_bytes=32 * 1024 * 1024,
        ),
    )(*inputs)

    logits = logits_padded[:B]
    infor_loss = jnp.sum(infor_partials[:B, 0]) / float(B * S)
    return logits, infor_loss


# ------------------------- pure-JAX reference for verification -------------------------
def reference_forward(tokens, params, kernel_sizes):
    emb = jnp.take(params["emb"], tokens, axis=0)                        # (B, S, E)
    h = jnp.tanh(emb @ params["w1"] + params["b1"])
    p = h @ params["w2"] + params["b2"]                                  # (B, S, 2)
    probs = jax.nn.softmax(p, axis=2)
    r = probs[:, :, 1:2]
    xp = emb * r
    B, S, E = emb.shape
    feats = []
    for i, f in enumerate(kernel_sizes):
        L = S - f + 1
        windows = jnp.concatenate([xp[:, j:j + L, :] for j in range(f)], axis=2)
        conv = windows @ params["wconv"][i] + params["bconv"][i]
        feats.append(jnp.max(jax.nn.relu(conv), axis=1))
    feat = jnp.concatenate(feats, axis=1)
    logits = feat @ params["wfc"] + params["bfc"]
    pos, neg = probs[:, :, 1], probs[:, :, 0]
    infor = jnp.mean(pos * jnp.log(pos + 1e-8) + neg * jnp.log(neg + 1e-8))
    return logits, infor


if __name__ == "__main__":
    # Small, module-consistent config.
    embed_num, embed_dim = 50, 16
    mask_hidden_dim, kernel_num, class_num = 32, 8, 2
    kernel_sizes = (3, 4, 5)
    batch, seq_len = 2, 12

    key = jax.random.PRNGKey(0)
    ks = jax.random.split(key, 16)

    emb = 0.1 * jax.random.normal(ks[0], (embed_num, embed_dim), jnp.float32)
    emb = emb.at[0].set(jax.random.uniform(ks[1], (embed_dim,), jnp.float32, -0.01, 0.01))
    emb = emb.at[1].set(0.0)  # padding_idx=1 row zeroed, as in the module init

    params = {
        "emb": emb,
        "w1": 0.1 * jax.random.normal(ks[2], (embed_dim, mask_hidden_dim), jnp.float32),
        "b1": 0.1 * jax.random.normal(ks[3], (1, mask_hidden_dim), jnp.float32),
        "w2": 0.1 * jax.random.normal(ks[4], (mask_hidden_dim, 2), jnp.float32),
        "b2": 0.1 * jax.random.normal(ks[5], (1, 2), jnp.float32),
        "wconv": tuple(
            0.1 * jax.random.normal(ks[6 + i], (f * embed_dim, kernel_num), jnp.float32)
            for i, f in enumerate(kernel_sizes)
        ),
        "bconv": tuple(
            0.1 * jax.random.normal(ks[9 + i], (1, kernel_num), jnp.float32)
            for i, _ in enumerate(kernel_sizes)
        ),
        "wfc": 0.1 * jax.random.normal(
            ks[12], (len(kernel_sizes) * kernel_num, class_num), jnp.float32
        ),
        "bfc": 0.1 * jax.random.normal(ks[13], (1, class_num), jnp.float32),
    }

    tokens = jax.random.randint(key, (batch, seq_len), 0, embed_num, dtype=jnp.int32)

    ref_logits, ref_infor = reference_forward(tokens, params, kernel_sizes)

    # f32 compute path: exact up to accumulation-order rounding (no approx reciprocal).
    logits, infor_loss = vmask_cnn_forward(
        tokens, params, kernel_sizes=kernel_sizes, compute_dtype=jnp.float32
    )
    jax.block_until_ready((logits, infor_loss))
    assert logits.shape == (batch, class_num)
    assert jnp.allclose(logits, ref_logits, atol=2e-3, rtol=2e-3), (logits, ref_logits)
    assert jnp.allclose(infor_loss, ref_infor, atol=2e-3, rtol=2e-3), (infor_loss, ref_infor)

    # Default bf16 MXU path (v6e/v7x feedback); looser tolerance for bf16 rounding.
    logits_bf, infor_bf = vmask_cnn_forward(tokens, params, kernel_sizes=kernel_sizes)
    jax.block_until_ready((logits_bf, infor_bf))
    assert jnp.allclose(logits_bf, ref_logits, atol=3e-2, rtol=3e-2), (logits_bf, ref_logits)
    assert jnp.allclose(infor_bf, ref_infor, atol=3e-2, rtol=3e-2), (infor_bf, ref_infor)

    print("KERNEL_OK")
</pallas_src>

<mosaic_0001>
module attributes {stable_mosaic.version = 11 : i64} {
  func.func @kernel(%arg0: i32, %arg1: memref<128x16xf32, #tpu.memory_space<vmem>>, %arg2: memref<16x32xf32, #tpu.memory_space<vmem>>, %arg3: memref<1x32xf32, #tpu.memory_space<vmem>>, %arg4: memref<32x2xf32, #tpu.memory_space<vmem>>, %arg5: memref<1x2xf32, #tpu.memory_space<vmem>>, %arg6: memref<16x120xf32, #tpu.memory_space<vmem>>, %arg7: memref<1x24xf32, #tpu.memory_space<vmem>>, %arg8: memref<1x10x24xf32, #tpu.memory_space<vmem>>, %arg9: memref<24x2xf32, #tpu.memory_space<vmem>>, %arg10: memref<1x2xf32, #tpu.memory_space<vmem>>, %arg11: memref<8x2xf32, #tpu.memory_space<vmem>>, %arg12: memref<8x1xf32, #tpu.memory_space<vmem>>) attributes {dimension_semantics = [#tpu.dimension_semantics<parallel>], iteration_bounds = array<i64: 1>, scalar_prefetch = 0 : i64, scratch_operands = 0 : i64, tpu.core_type = #tpu.core_type<tc>, window_params = [{transform_indices = @transform_0, window_bounds = array<i64: 128, 16>}, {pipeline_mode = #tpu.pipeline_mode<synchronous>, transform_indices = @transform_1, window_bounds = array<i64: 16, 32>}, {pipeline_mode = #tpu.pipeline_mode<synchronous>, transform_indices = @transform_2, window_bounds = array<i64: 1, 32>}, {pipeline_mode = #tpu.pipeline_mode<synchronous>, transform_indices = @transform_3, window_bounds = array<i64: 32, 2>}, {pipeline_mode = #tpu.pipeline_mode<synchronous>, transform_indices = @transform_4, window_bounds = array<i64: 1, 2>}, {pipeline_mode = #tpu.pipeline_mode<synchronous>, transform_indices = @transform_5, window_bounds = array<i64: 16, 120>}, {pipeline_mode = #tpu.pipeline_mode<synchronous>, transform_indices = @transform_6, window_bounds = array<i64: 1, 24>}, {pipeline_mode = #tpu.pipeline_mode<synchronous>, transform_indices = @transform_7, window_bounds = array<i64: 1, 10, 24>}, {pipeline_mode = #tpu.pipeline_mode<synchronous>, transform_indices = @transform_8, window_bounds = array<i64: 24, 2>}, {pipeline_mode = #tpu.pipeline_mode<synchronous>, transform_indices = @transform_9, window_bounds = array<i64: 1, 2>}, {transform_indices = @transform_10, window_bounds = array<i64: 8, 2>}, {transform_indices = @transform_11, window_bounds = array<i64: 8, 1>}]} {
    %c0 = arith.constant 0 : index
    %c0_0 = arith.constant 0 : index
    %0 = vector.load %arg1[%c0, %c0_0] : memref<128x16xf32, #tpu.memory_space<vmem>>, vector<128x16xf32>
    %c0_1 = arith.constant 0 : index
    %c0_2 = arith.constant 0 : index
    %1 = vector.load %arg2[%c0_1, %c0_2] : memref<16x32xf32, #tpu.memory_space<vmem>>, vector<16x32xf32>
    %cst = arith.constant dense<0.000000e+00> : vector<128x32xf32>
    %2 = tpu.matmul %0, %1, %cst {dimension_numbers = #tpu.dot_dimension_numbers<[1], [0], [0], [1], [0, 0, 1, 1], [], []>} : vector<128x16xf32>, vector<16x32xf32>, vector<128x32xf32> -> vector<128x32xf32>
    %c0_3 = arith.constant 0 : index
    %c0_4 = arith.constant 0 : index
    %3 = vector.load %arg3[%c0_3, %c0_4] : memref<1x32xf32, #tpu.memory_space<vmem>>, vector<1x32xf32>
    %4 = vector.broadcast %3 : vector<1x32xf32> to vector<128x32xf32>
    %5 = arith.addf %2, %4 : vector<128x32xf32>
    %6 = math.tanh %5 : vector<128x32xf32>
    %c0_5 = arith.constant 0 : index
    %c0_6 = arith.constant 0 : index
    %7 = vector.load %arg4[%c0_5, %c0_6] : memref<32x2xf32, #tpu.memory_space<vmem>>, vector<32x2xf32>
    %cst_7 = arith.constant dense<0.000000e+00> : vector<128x2xf32>
    %8 = tpu.matmul %6, %7, %cst_7 {dimension_numbers = #tpu.dot_dimension_numbers<[1], [0], [0], [1], [0, 0, 1, 1], [], []>} : vector<128x32xf32>, vector<32x2xf32>, vector<128x2xf32> -> vector<128x2xf32>
    %c0_8 = arith.constant 0 : index
    %c0_9 = arith.constant 0 : index
    %9 = vector.load %arg5[%c0_8, %c0_9] : memref<1x2xf32, #tpu.memory_space<vmem>>, vector<1x2xf32>
    %10 = vector.broadcast %9 : vector<1x2xf32> to vector<128x2xf32>
    %11 = arith.addf %8, %10 : vector<128x2xf32>
    %12 = vector.extract_strided_slice %11 {offsets = [0, 1], sizes = [128, 1], strides = [1, 1]} : vector<128x2xf32> to vector<128x1xf32>
    %13 = vector.extract_strided_slice %11 {offsets = [0, 0], sizes = [128, 1], strides = [1, 1]} : vector<128x2xf32> to vector<128x1xf32>
    %14 = arith.subf %12, %13 : vector<128x1xf32>
    %cst_10 = arith.constant 5.000000e-01 : f32
    %15 = vector.broadcast %cst_10 : f32 to vector<128x1xf32>
    %16 = arith.mulf %15, %14 : vector<128x1xf32>
    %17 = math.tanh %16 : vector<128x1xf32>
    %cst_11 = arith.constant 1.000000e+00 : f32
    %18 = vector.broadcast %cst_11 : f32 to vector<128x1xf32>
    %19 = arith.addf %17, %18 : vector<128x1xf32>
    %cst_12 = arith.constant 5.000000e-01 : f32
    %20 = vector.broadcast %cst_12 : f32 to vector<128x1xf32>
    %21 = arith.mulf %20, %19 : vector<128x1xf32>
    %cst_13 = arith.constant 1.000000e+00 : f32
    %22 = vector.broadcast %cst_13 : f32 to vector<128x1xf32>
    %23 = arith.subf %22, %21 : vector<128x1xf32>
    %cst_14 = arith.constant 9.99999993E-9 : f32
    %24 = vector.broadcast %cst_14 : f32 to vector<128x1xf32>
    %25 = arith.addf %21, %24 : vector<128x1xf32>
    %26 = math.log %25 : vector<128x1xf32>
    %27 = arith.mulf %21, %26 : vector<128x1xf32>
    %cst_15 = arith.constant 9.99999993E-9 : f32
    %28 = vector.broadcast %cst_15 : f32 to vector<128x1xf32>
    %29 = arith.addf %23, %28 : vector<128x1xf32>
    %30 = math.log %29 : vector<128x1xf32>
    %31 = arith.mulf %23, %30 : vector<128x1xf32>
    %32 = arith.addf %27, %31 : vector<128x1xf32>
    %33 = vector.shape_cast %32 : vector<128x1xf32> to vector<8x16xf32>
    %34 = tpu.iota {dimensions = array<i32: 1>} : vector<1x16xi32>
    %c12_i32 = arith.constant 12 : i32
    %35 = vector.broadcast %c12_i32 : i32 to vector<1x16xi32>
    %36 = arith.cmpi slt, %34, %35 : vector<1x16xi32>
    %cst_16 = arith.constant 0.000000e+00 : f32
    %37 = vector.shape_cast %36 : vector<1x16xi1> to vector<1x16xi1>
    %38 = vector.broadcast %37 : vector<1x16xi1> to vector<8x16xi1>
    %39 = vector.broadcast %cst_16 : f32 to vector<8x16xf32>
    %40 = arith.select %38, %33, %39 : vector<8x16xi1>, vector<8x16xf32>
    %cst_17 = arith.constant dense<0.000000e+00> : vector<8xf32>
    %41 = vector.multi_reduction <add>, %40, %cst_17 [1] : vector<8x16xf32> to vector<8xf32>
    %42 = vector.shape_cast %41 : vector<8xf32> to vector<8x1xf32>
    %c0_18 = arith.constant 0 : index
    %c0_19 = arith.constant 0 : index
    %43 = vector.load %arg12[%c0_18, %c0_19] : memref<8x1xf32, #tpu.memory_space<vmem>>, vector<8x1xf32>
    tpu.vector_store %arg12[%c0_18, %c0_19], %42 {strides = array<i32>} : memref<8x1xf32, #tpu.memory_space<vmem>>, vector<8x1xf32>,
    %44 = vector.broadcast %21 : vector<128x1xf32> to vector<128x16xf32>
    %45 = arith.mulf %0, %44 : vector<128x16xf32>
    %c0_20 = arith.constant 0 : index
    %c0_21 = arith.constant 0 : index
    %46 = vector.load %arg6[%c0_20, %c0_21] : memref<16x120xf32, #tpu.memory_space<vmem>>, vector<16x120xf32>
    %cst_22 = arith.constant dense<0.000000e+00> : vector<128x120xf32>
    %47 = tpu.matmul %45, %46, %cst_22 {dimension_numbers = #tpu.dot_dimension_numbers<[1], [0], [0], [1], [0, 0, 1, 1], [], []>} : vector<128x16xf32>, vector<16x120xf32>, vector<128x120xf32> -> vector<128x120xf32>
    %48 = vector.shape_cast %47 : vector<128x120xf32> to vector<8x16x120xf32>
    %49 = vector.extract_strided_slice %48 {offsets = [0, 0, 0], sizes = [8, 10, 24], strides = [1, 1, 1]} : vector<8x16x120xf32> to vector<8x10x24xf32>
    %50 = vector.extract_strided_slice %48 {offsets = [0, 1, 24], sizes = [8, 10, 24], strides = [1, 1, 1]} : vector<8x16x120xf32> to vector<8x10x24xf32>
    %51 = arith.addf %49, %50 : vector<8x10x24xf32>
    %52 = vector.extract_strided_slice %48 {offsets = [0, 2, 48], sizes = [8, 10, 24], strides = [1, 1, 1]} : vector<8x16x120xf32> to vector<8x10x24xf32>
    %53 = arith.addf %51, %52 : vector<8x10x24xf32>
    %54 = vector.extract_strided_slice %48 {offsets = [0, 3, 72], sizes = [8, 10, 24], strides = [1, 1, 1]} : vector<8x16x120xf32> to vector<8x10x24xf32>
    %55 = arith.addf %53, %54 : vector<8x10x24xf32>
    %56 = vector.extract_strided_slice %48 {offsets = [0, 4, 96], sizes = [8, 10, 24], strides = [1, 1, 1]} : vector<8x16x120xf32> to vector<8x10x24xf32>
    %57 = arith.addf %55, %56 : vector<8x10x24xf32>
    %c0_23 = arith.constant 0 : index
    %c0_24 = arith.constant 0 : index
    %58 = vector.load %arg7[%c0_23, %c0_24] : memref<1x24xf32, #tpu.memory_space<vmem>>, vector<1x24xf32>
    %59 = vector.shape_cast %58 : vector<1x24xf32> to vector<1x1x24xf32>
    %60 = vector.broadcast %59 : vector<1x1x24xf32> to vector<8x10x24xf32>
    %61 = arith.addf %57, %60 : vector<8x10x24xf32>
    %cst_25 = arith.constant 0.000000e+00 : f32
    %62 = vector.broadcast %cst_25 : f32 to vector<8x10x24xf32>
    %63 = arith.maximumf %61, %62 : vector<8x10x24xf32>
    %c0_26 = arith.constant 0 : index
    %c0_27 = arith.constant 0 : index
    %c0_28 = arith.constant 0 : index
    %64 = vector.load %arg8[%c0_26, %c0_27, %c0_28] : memref<1x10x24xf32, #tpu.memory_space<vmem>>, vector<1x10x24xf32>
    %65 = vector.broadcast %64 : vector<1x10x24xf32> to vector<8x10x24xf32>
    %66 = arith.mulf %63, %65 : vector<8x10x24xf32>
    %cst_29 = arith.constant dense<0xFF800000> : vector<8x24xf32>
    %67 = vector.multi_reduction <maximumf>, %66, %cst_29 [1] : vector<8x10x24xf32> to vector<8x24xf32>
    %c0_30 = arith.constant 0 : index
    %c0_31 = arith.constant 0 : index
    %68 = vector.load %arg9[%c0_30, %c0_31] : memref<24x2xf32, #tpu.memory_space<vmem>>, vector<24x2xf32>
    %cst_32 = arith.constant dense<0.000000e+00> : vector<8x2xf32>
    %69 = tpu.matmul %67, %68, %cst_32 {dimension_numbers = #tpu.dot_dimension_numbers<[1], [0], [0], [1], [0, 0, 1, 1], [], []>} : vector<8x24xf32>, vector<24x2xf32>, vector<8x2xf32> -> vector<8x2xf32>
    %c0_33 = arith.constant 0 : index
    %c0_34 = arith.constant 0 : index
    %70 = vector.load %arg10[%c0_33, %c0_34] : memref<1x2xf32, #tpu.memory_space<vmem>>, vector<1x2xf32>
    %71 = vector.broadcast %70 : vector<1x2xf32> to vector<8x2xf32>
    %72 = arith.addf %69, %71 : vector<8x2xf32>
    %c0_35 = arith.constant 0 : index
    %c0_36 = arith.constant 0 : index
    %73 = vector.load %arg11[%c0_35, %c0_36] : memref<8x2xf32, #tpu.memory_space<vmem>>, vector<8x2xf32>
    tpu.vector_store %arg11[%c0_35, %c0_36], %72 {strides = array<i32>} : memref<8x2xf32, #tpu.memory_space<vmem>>, vector<8x2xf32>,
    return
  }
  func.func @transform_0(%arg0: i32) -> (i32, i32) {
    %c0_i32 = arith.constant 0 : i32
    %c0_i32_0 = arith.constant 0 : i32
    return %arg0, %c0_i32 : i32, i32
  }
  func.func @transform_1(%arg0: i32) -> (i32, i32) {
    %c0_i32 = arith.constant 0 : i32
    %c0_i32_0 = arith.constant 0 : i32
    %c0_i32_1 = arith.constant 0 : i32
    return %c0_i32, %c0_i32_0 : i32, i32
  }
  func.func @transform_2(%arg0: i32) -> (i32, i32) {
    %c0_i32 = arith.constant 0 : i32
    %c0_i32_0 = arith.constant 0 : i32
    %c0_i32_1 = arith.constant 0 : i32
    return %c0_i32, %c0_i32_0 : i32, i32
  }
  func.func @transform_3(%arg0: i32) -> (i32, i32) {
    %c0_i32 = arith.constant 0 : i32
    %c0_i32_0 = arith.constant 0 : i32
    %c0_i32_1 = arith.constant 0 : i32
    return %c0_i32, %c0_i32_0 : i32, i32
  }
  func.func @transform_4(%arg0: i32) -> (i32, i32) {
    %c0_i32 = arith.constant 0 : i32
    %c0_i32_0 = arith.constant 0 : i32
    %c0_i32_1 = arith.constant 0 : i32
    return %c0_i32, %c0_i32_0 : i32, i32
  }
  func.func @transform_5(%arg0: i32) -> (i32, i32) {
    %c0_i32 = arith.constant 0 : i32
    %c0_i32_0 = arith.constant 0 : i32
    %c0_i32_1 = arith.constant 0 : i32
    return %c0_i32, %c0_i32_0 : i32, i32
  }
  func.func @transform_6(%arg0: i32) -> (i32, i32) {
    %c0_i32 = arith.constant 0 : i32
    %c0_i32_0 = arith.constant 0 : i32
    %c0_i32_1 = arith.constant 0 : i32
    return %c0_i32, %c0_i32_0 : i32, i32
  }
  func.func @transform_7(%arg0: i32) -> (i32, i32, i32) {
    %c0_i32 = arith.constant 0 : i32
    %c0_i32_0 = arith.constant 0 : i32
    %c0_i32_1 = arith.constant 0 : i32
    %c0_i32_2 = arith.constant 0 : i32
    return %c0_i32, %c0_i32_0, %c0_i32_1 : i32, i32, i32
  }
  func.func @transform_8(%arg0: i32) -> (i32, i32) {
    %c0_i32 = arith.constant 0 : i32
    %c0_i32_0 = arith.constant 0 : i32
    %c0_i32_1 = arith.constant 0 : i32
    return %c0_i32, %c0_i32_0 : i32, i32
  }
  func.func @transform_9(%arg0: i32) -> (i32, i32) {
    %c0_i32 = arith.constant 0 : i32
    %c0_i32_0 = arith.constant 0 : i32
    %c0_i32_1 = arith.constant 0 : i32
    return %c0_i32, %c0_i32_0 : i32, i32
  }
  func.func @transform_10(%arg0: i32) -> (i32, i32) {
    %c0_i32 = arith.constant 0 : i32
    %c0_i32_0 = arith.constant 0 : i32
    return %arg0, %c0_i32 : i32, i32
  }
  func.func @transform_11(%arg0: i32) -> (i32, i32) {
    %c0_i32 = arith.constant 0 : i32
    %c0_i32_0 = arith.constant 0 : i32
    return %arg0, %c0_i32 : i32, i32
  }
}

</mosaic_0001>

<llo_original>
// kernel: vmask_cnn_forward.1
$region0: #{vmask_cnn_forward.1}
  #allocation0 [shape = 'u32[]', space=smem, size = 0x4, offset = 0x4, fixed_abs, tag = 'smem constant byte address 0x4 - core index']
  #allocation1 [shape = 'u32[144,128]{1,0:T(1,128)}', space=vmem, size = 0x12000, scoped, tag = 'internal scratch']
  %s0 = inlined_call_operand.vmem [shape: f32[128,16], index: 0, kind: input, shape index: {}]
  %s1 = inlined_call_operand.vmem [shape: f32[16,32], index: 1, kind: input, shape index: {}]
  %s2 = inlined_call_operand.vmem [shape: f32[1,32], index: 2, kind: input, shape index: {}]
  %s3 = inlined_call_operand.vmem [shape: f32[32,2], index: 3, kind: input, shape index: {}]
  %s4 = inlined_call_operand.vmem [shape: f32[1,2], index: 4, kind: input, shape index: {}]
  %s5 = inlined_call_operand.vmem [shape: f32[16,120], index: 5, kind: input, shape index: {}]
  %s6 = inlined_call_operand.vmem [shape: f32[1,24], index: 6, kind: input, shape index: {}]
  %s7 = inlined_call_operand.vmem [shape: f32[1,10,24], index: 7, kind: input, shape index: {}]
  %s8 = inlined_call_operand.vmem [shape: f32[24,2], index: 8, kind: input, shape index: {}]
  %s9 = inlined_call_operand.vmem [shape: f32[1,2], index: 9, kind: input, shape index: {}]
  %s10 = inlined_call_operand.vmem [shape: f32[8,2], index: 10, kind: output, shape index: {0}]
  %s11 = inlined_call_operand.vmem [shape: f32[8,1], index: 11, kind: output, shape index: {1}]
  %12 = xla_tuple %s10, %s11
  %s13 = sld [smem:[#allocation0]]
  $region58: #{vmask_cnn_forward.1} parent=0
    _
  %s15 = ssub.s32 1, %s13
  %s16 = scalar_select 0, %s15, %s13
  // Predicated region
  $region2: #{vmask_cnn_forward.1} parent=0 // pred_check
    _
  $region3: #{vmask_cnn_forward.1} parent=0 // pred_check_branch
    %18 = sbr.rel (0) target = $region5
  $region4: #{vmask_cnn_forward.1} parent=0 // pred_region
    _
  $region5: #{vmask_cnn_forward.1} parent=0 // pred_fallthru
    _
  // Predicated region
  $region6: #{vmask_cnn_forward.1} parent=0 // pred_check
    _
  $region7: #{vmask_cnn_forward.1} parent=0 // pred_check_branch
    %20 = sbr.rel (0) target = $region9
  $region8: #{vmask_cnn_forward.1} parent=0 // pred_region
    _
  $region9: #{vmask_cnn_forward.1} parent=0 // pred_fallthru
    _
  // Predicated region
  $region10: #{vmask_cnn_forward.1} parent=0 // pred_check
    _
  $region11: #{vmask_cnn_forward.1} parent=0 // pred_check_branch
    %22 = sbr.rel (0) target = $region13
  $region12: #{vmask_cnn_forward.1} parent=0 // pred_region
    _
  $region13: #{vmask_cnn_forward.1} parent=0 // pred_fallthru
    _
  // Predicated region
  $region14: #{vmask_cnn_forward.1} parent=0 // pred_check
    _
  $region15: #{vmask_cnn_forward.1} parent=0 // pred_check_branch
    %24 = sbr.rel (0) target = $region17
  $region16: #{vmask_cnn_forward.1} parent=0 // pred_region
    _
  $region17: #{vmask_cnn_forward.1} parent=0 // pred_fallthru
    _
  // Predicated region
  $region18: #{vmask_cnn_forward.1} parent=0 // pred_check
    _
  $region19: #{vmask_cnn_forward.1} parent=0 // pred_check_branch
    %26 = sbr.rel (0) target = $region21
  $region20: #{vmask_cnn_forward.1} parent=0 // pred_region
    _
  $region21: #{vmask_cnn_forward.1} parent=0 // pred_fallthru
    _
  // Predicated region
  $region22: #{vmask_cnn_forward.1} parent=0 // pred_check
    _
  $region23: #{vmask_cnn_forward.1} parent=0 // pred_check_branch
    %28 = sbr.rel (0) target = $region25
  $region24: #{vmask_cnn_forward.1} parent=0 // pred_region
    _
  $region25: #{vmask_cnn_forward.1} parent=0 // pred_fallthru
    _
  // Predicated region
  $region26: #{vmask_cnn_forward.1} parent=0 // pred_check
    _
  $region27: #{vmask_cnn_forward.1} parent=0 // pred_check_branch
    %30 = sbr.rel (0) target = $region29
  $region28: #{vmask_cnn_forward.1} parent=0 // pred_region
    _
  $region29: #{vmask_cnn_forward.1} parent=0 // pred_fallthru
    _
  // Predicated region
  $region30: #{vmask_cnn_forward.1} parent=0 // pred_check
    _
  $region31: #{vmask_cnn_forward.1} parent=0 // pred_check_branch
    %32 = sbr.rel (0) target = $region33
  $region32: #{vmask_cnn_forward.1} parent=0 // pred_region
    _
  $region33: #{vmask_cnn_forward.1} parent=0 // pred_fallthru
    _
  // Predicated region
  $region34: #{vmask_cnn_forward.1} parent=0 // pred_check
    _
  $region35: #{vmask_cnn_forward.1} parent=0 // pred_check_branch
    %34 = sbr.rel (0) target = $region37
  $region36: #{vmask_cnn_forward.1} parent=0 // pred_region
    _
  $region37: #{vmask_cnn_forward.1} parent=0 // pred_fallthru
    _
  // Predicated region
  $region38: #{vmask_cnn_forward.1} parent=0 // pred_check
    _
  $region39: #{vmask_cnn_forward.1} parent=0 // pred_check_branch
    %36 = sbr.rel (0) target = $region41
  $region40: #{vmask_cnn_forward.1} parent=0 // pred_region
    _
  $region41: #{vmask_cnn_forward.1} parent=0 // pred_fallthru
    _
  %v37 = vld [vmem:[%s0] sm:$0xff]
  %v38 = vld [vmem:[%s0 + $0x8] sm:$0xff]
  %v39 = vld [vmem:[%s0 + $0x10] sm:$0xff]
  %v40 = vld [vmem:[%s0 + $0x18] sm:$0xff]
  %v41 = vld [vmem:[%s0 + $0x20] sm:$0xff]
  %v42 = vld [vmem:[%s0 + $0x28] sm:$0xff]
  %v43 = vld [vmem:[%s0 + $0x30] sm:$0xff]
  %v44 = vld [vmem:[%s0 + $0x38] sm:$0xff]
  %v45 = vld [vmem:[%s0 + $0x40] sm:$0xff]
  %v46 = vld [vmem:[%s0 + $0x48] sm:$0xff]
  %v47 = vld [vmem:[%s0 + $0x50] sm:$0xff]
  %v48 = vld [vmem:[%s0 + $0x58] sm:$0xff]
  %v49 = vld [vmem:[%s0 + $0x60] sm:$0xff]
  %v50 = vld [vmem:[%s0 + $0x68] sm:$0xff]
  %v51 = vld [vmem:[%s0 + $0x70] sm:$0xff]
  %v52 = vld [vmem:[%s0 + $0x78] sm:$0xff]
  %v53 = vld [vmem:[%s1] sm:$0xff]
  %v54 = vld [vmem:[%s1 + $0x8] sm:$0xff]
  %v55 = vld [vmem:[%s2] sm:$0x1]
  %v57 = vlaneseq
  %v58 = vshrl.u32 %v57, 7
  %v59 = vsub.s32 0, %v58
  %v60 = vrot.slane %v55, %v59
  %vm62 = vcmask 130048
  %v64 = vsel %vm62, %v37, 0
  %v67 = vsel %vm62, %v38, 0
  %v70 = vsel %vm62, %v39, 0
  %v73 = vsel %vm62, %v40, 0
  %v76 = vsel %vm62, %v41, 0
  %v79 = vsel %vm62, %v42, 0
  %v82 = vsel %vm62, %v43, 0
  %v85 = vsel %vm62, %v44, 0
  %v88 = vsel %vm62, %v45, 0
  %v91 = vsel %vm62, %v46, 0
  %v94 = vsel %vm62, %v47, 0
  %v97 = vsel %vm62, %v48, 0
  %v100 = vsel %vm62, %v49, 0
  %v103 = vsel %vm62, %v50, 0
  %v106 = vsel %vm62, %v51, 0
  %v109 = vsel %vm62, %v52, 0
  %111 = vmatprep.subr.mxu0 0.0
  %112 = vmatpush1.msra.mxu0 %v53
  %113 = vmatprep.subr.mxu0 0.0
  %114 = vmatpush1.msra.mxu0 %v54
  %115 = vmatprep.subr.mxu0 0.0
  %116 = vmatpush1.msra.mxu0 0.0
  %117 = vmatprep.subr.mxu0 0.0
  %118 = vmatpush1.msra.mxu0 0.0
  %119 = vmatprep.subr.mxu0 0.0
  %120 = vmatpush1.msra.mxu0 0.0
  %121 = vmatprep.subr.mxu0 0.0
  %122 = vmatpush1.msra.mxu0 0.0
  %123 = vmatprep.subr.mxu0 0.0
  %124 = vmatpush1.msra.mxu0 0.0
  %125 = vmatprep.subr.mxu0 0.0
  %126 = vmatpush1.msra.mxu0 0.0
  %127 = vmatprep.subr.mxu0 0.0
  %128 = vmatpush1.msra.mxu0 0.0
  %129 = vmatprep.subr.mxu0 0.0
  %130 = vmatpush1.msra.mxu0 0.0
  %131 = vmatprep.subr.mxu0 0.0
  %132 = vmatpush1.msra.mxu0 0.0
  %133 = vmatprep.subr.mxu0 0.0
  %134 = vmatpush1.msra.mxu0 0.0
  %135 = vmatprep.subr.mxu0 0.0
  %136 = vmatpush1.msra.mxu0 0.0
  %137 = vmatprep.subr.mxu0 0.0
  %138 = vmatpush1.msra.mxu0 0.0
  %139 = vmatprep.subr.mxu0 0.0
  %140 = vmatpush1.msra.mxu0 0.0
  %141 = vmatprep.subr.mxu0 0.0
  %142 = vmatpush1.msra.mxu0 0.0
  %143 = vmatprep.subr.mxu0 0.0
  %144 = vmatpush1.msra.mxu0 0.0
  %145 = vmatprep.subr.mxu0 0.0
  %146 = vmatpush1.msra.mxu0 0.0
  %147 = vmatprep.subr.mxu0 0.0
  %148 = vmatpush1.msra.mxu0 0.0
  %149 = vmatprep.subr.mxu0 0.0
  %150 = vmatpush1.msra.mxu0 0.0
  %151 = vmatprep.subr.mxu0 0.0
  %152 = vmatpush1.msra.mxu0 0.0
  %153 = vmatprep.subr.mxu0 0.0
  %154 = vmatpush1.msra.mxu0 0.0
  %155 = vmatprep.subr.mxu0 0.0
  %156 = vmatpush1.msra.mxu0 0.0
  %157 = vmatprep.subr.mxu0 0.0
  %158 = vmatpush1.msra.mxu0 0.0
  %159 = vmatprep.subr.mxu0 0.0
  %160 = vmatpush1.msra.mxu0 0.0
  %161 = vmatprep.subr.mxu0 0.0
  %162 = vmatpush1.msra.mxu0 0.0
  %163 = vmatprep.subr.mxu0 0.0
  %164 = vmatpush1.msra.mxu0 0.0
  %165 = vmatprep.subr.mxu0 0.0
  %166 = vmatpush1.msra.mxu0 0.0
  %167 = vmatprep.subr.mxu0 0.0
  %168 = vmatpush1.msra.mxu0 0.0
  %169 = vmatprep.subr.mxu0 0.0
  %170 = vmatpush1.msra.mxu0 0.0
  %171 = vmatprep.subr.mxu0 0.0
  %172 = vmatpush1.msra.mxu0 0.0
  %173 = vmatprep.subr.mxu0 0.0
  %174 = vmatpush1.msra.mxu0 0.0
  %175 = vmatprep.mubr.f32.mxu0 0.0
  %176 = vmatmul.mubr.f32.gmra.mrb[0].mxu0 %v64
  %v177 = vpop.f32.mrb[0].mxu0
  %v178 = vadd.f32 %v60, %v177
  %v179 = vpop.f32.mrb[0].mxu0
  %180 = vmatprep.mubr.f32.mxu0 0.0
  %181 = vmatmul.mubr.f32.gmra.mrb[0].mxu0 %v67
  %v182 = vpop.f32.mrb[0].mxu0
  %v183 = vadd.f32 %v60, %v182
  %v184 = vpop.f32.mrb[0].mxu0
  %185 = vmatprep.mubr.f32.mxu0 0.0
  %186 = vmatmul.mubr.f32.gmra.mrb[0].mxu0 %v70
  %v187 = vpop.f32.mrb[0].mxu0
  %v188 = vadd.f32 %v60, %v187
  %v189 = vpop.f32.mrb[0].mxu0
  %190 = vmatprep.mubr.f32.mxu0 0.0
  %191 = vmatmul.mubr.f32.gmra.mrb[0].mxu0 %v73
  %v192 = vpop.f32.mrb[0].mxu0
  %v193 = vadd.f32 %v60, %v192
  %v194 = vpop.f32.mrb[0].mxu0
  %195 = vmatprep.mubr.f32.mxu0 0.0
  %196 = vmatmul.mubr.f32.gmra.mrb[0].mxu0 %v76
  %v197 = vpop.f32.mrb[0].mxu0
  %v198 = vadd.f32 %v60, %v197
  %v199 = vpop.f32.mrb[0].mxu0
  %200 = vmatprep.mubr.f32.mxu0 0.0
  %201 = vmatmul.mubr.f32.gmra.mrb[0].mxu0 %v79
  %v202 = vpop.f32.mrb[0].mxu0
  %v203 = vadd.f32 %v60, %v202
  %v204 = vpop.f32.mrb[0].mxu0
  %205 = vmatprep.mubr.f32.mxu0 0.0
  %206 = vmatmul.mubr.f32.gmra.mrb[0].mxu0 %v82
  %v207 = vpop.f32.mrb[0].mxu0
  %v208 = vadd.f32 %v60, %v207
  %v209 = vpop.f32.mrb[0].mxu0
  %210 = vmatprep.mubr.f32.mxu0 0.0
  %211 = vmatmul.mubr.f32.gmra.mrb[0].mxu0 %v85
  %v212 = vpop.f32.mrb[0].mxu0
  %v213 = vadd.f32 %v60, %v212
  %v214 = vpop.f32.mrb[0].mxu0
  %215 = vmatprep.mubr.f32.mxu0 0.0
  %216 = vmatmul.mubr.f32.gmra.mrb[0].mxu0 %v88
  %v217 = vpop.f32.mrb[0].mxu0
  %v218 = vadd.f32 %v60, %v217
  %v219 = vpop.f32.mrb[0].mxu0
  %220 = vmatprep.mubr.f32.mxu0 0.0
  %221 = vmatmul.mubr.f32.gmra.mrb[0].mxu0 %v91
  %v222 = vpop.f32.mrb[0].mxu0
  %v223 = vadd.f32 %v60, %v222
  %v224 = vpop.f32.mrb[0].mxu0
  %225 = vmatprep.mubr.f32.mxu0 0.0
  %226 = vmatmul.mubr.f32.gmra.mrb[0].mxu0 %v94
  %v227 = vpop.f32.mrb[0].mxu0
  %v228 = vadd.f32 %v60, %v227
  %v229 = vpop.f32.mrb[0].mxu0
  %230 = vmatprep.mubr.f32.mxu0 0.0
  %231 = vmatmul.mubr.f32.gmra.mrb[0].mxu0 %v97
  %v232 = vpop.f32.mrb[0].mxu0
  %v233 = vadd.f32 %v60, %v232
  %v234 = vpop.f32.mrb[0].mxu0
  %235 = vmatprep.mubr.f32.mxu0 0.0
  %236 = vmatmul.mubr.f32.gmra.mrb[0].mxu0 %v100
  %v237 = vpop.f32.mrb[0].mxu0
  %v238 = vadd.f32 %v60, %v237
  %v239 = vpop.f32.mrb[0].mxu0
  %240 = vmatprep.mubr.f32.mxu0 0.0
  %241 = vmatmul.mubr.f32.gmra.mrb[0].mxu0 %v103
  %v242 = vpop.f32.mrb[0].mxu0
  %v243 = vadd.f32 %v60, %v242
  %v244 = vpop.f32.mrb[0].mxu0
  %245 = vmatprep.mubr.f32.mxu0 0.0
  %246 = vmatmul.mubr.f32.gmra.mrb[0].mxu0 %v106
  %v247 = vpop.f32.mrb[0].mxu0
  %v248 = vadd.f32 %v60, %v247
  %v249 = vpop.f32.mrb[0].mxu0
  %250 = vmatprep.mubr.f32.mxu0 0.0
  %251 = vmatmul.mubr.f32.gmra.mrb[0].mxu0 %v109
  %v252 = vpop.f32.mrb[0].mxu0
  %v253 = vadd.f32 %v60, %v252
  %v254 = vpop.f32.mrb[0].mxu0
  %255 = vdwg.mxu0
  %v256 = vtanh.pop %v178
  %v257 = vtanh.pop %v183
  %v258 = vtanh.pop %v188
  %v259 = vtanh.pop %v193
  %v260 = vtanh.pop %v198
  %v261 = vtanh.pop %v203
  %v262 = vtanh.pop %v208
  %v263 = vtanh.pop %v213
  %v264 = vtanh.pop %v218
  %v265 = vtanh.pop %v223
  %v266 = vtanh.pop %v228
  %v267 = vtanh.pop %v233
  %v268 = vtanh.pop %v238
  %v269 = vtanh.pop %v243
  %v270 = vtanh.pop %v248
  %v271 = vtanh.pop %v253
  %v272 = vld [vmem:[%s3] sm:$0xff]
  %v273 = vld [vmem:[%s3 + $0x8] sm:$0xff]
  %v274 = vld [vmem:[%s3 + $0x10] sm:$0xff]
  %v275 = vld [vmem:[%s3 + $0x18] sm:$0xff]
  %v276 = vld [vmem:[%s4] sm:$0x1]
  %v278 = vlaneseq
  %v279 = vshrl.u32 %v278, 7
  %v280 = vsub.s32 0, %v279
  %v281 = vrot.slane %v276, %v280
  %vm283 = vcmask 261120
  %v285 = vsel %vm283, %v256, 0
  %v288 = vsel %vm283, %v257, 0
  %v291 = vsel %vm283, %v258, 0
  %v294 = vsel %vm283, %v259, 0
  %v297 = vsel %vm283, %v260, 0
  %v300 = vsel %vm283, %v261, 0
  %v303 = vsel %vm283, %v262, 0
  %v306 = vsel %vm283, %v263, 0
  %v309 = vsel %vm283, %v264, 0
  %v312 = vsel %vm283, %v265, 0
  %v315 = vsel %vm283, %v266, 0
  %v318 = vsel %vm283, %v267, 0
  %v321 = vsel %vm283, %v268, 0
  %v324 = vsel %vm283, %v269, 0
  %v327 = vsel %vm283, %v270, 0
  %v330 = vsel %vm283, %v271, 0
  %332 = vmatprep.subr.mxu0 0.0
  %333 = vmatpush1.msra.mxu0 %v272
  %334 = vmatprep.subr.mxu0 0.0
  %335 = vmatpush1.msra.mxu0 %v273
  %336 = vmatprep.subr.mxu0 0.0
  %337 = vmatpush1.msra.mxu0 %v274
  %338 = vmatprep.subr.mxu0 0.0
  %339 = vmatpush1.msra.mxu0 %v275
  %340 = vmatprep.subr.mxu0 0.0
  %341 = vmatpush1.msra.mxu0 0.0
  %342 = vmatprep.subr.mxu0 0.0
  %343 = vmatpush1.msra.mxu0 0.0
  %344 = vmatprep.subr.mxu0 0.0
  %345 = vmatpush1.msra.mxu0 0.0
  %346 = vmatprep.subr.mxu0 0.0
  %347 = vmatpush1.msra.mxu0 0.0
  %348 = vmatprep.subr.mxu0 0.0
  %349 = vmatpush1.msra.mxu0 0.0
  %350 = vmatprep.subr.mxu0 0.0
  %351 = vmatpush1.msra.mxu0 0.0
  %352 = vmatprep.subr.mxu0 0.0
  %353 = vmatpush1.msra.mxu0 0.0
  %354 = vmatprep.subr.mxu0 0.0
  %355 = vmatpush1.msra.mxu0 0.0
  %356 = vmatprep.subr.mxu0 0.0
  %357 = vmatpush1.msra.mxu0 0.0
  %358 = vmatprep.subr.mxu0 0.0
  %359 = vmatpush1.msra.mxu0 0.0
  %360 = vmatprep.subr.mxu0 0.0
  %361 = vmatpush1.msra.mxu0 0.0
  %362 = vmatprep.subr.mxu0 0.0
  %363 = vmatpush1.msra.mxu0 0.0
  %364 = vmatprep.subr.mxu0 0.0
  %365 = vmatpush1.msra.mxu0 0.0
  %366 = vmatprep.subr.mxu0 0.0
  %367 = vmatpush1.msra.mxu0 0.0
  %368 = vmatprep.subr.mxu0 0.0
  %369 = vmatpush1.msra.mxu0 0.0
  %370 = vmatprep.subr.mxu0 0.0
  %371 = vmatpush1.msra.mxu0 0.0
  %372 = vmatprep.subr.mxu0 0.0
  %373 = vmatpush1.msra.mxu0 0.0
  %374 = vmatprep.subr.mxu0 0.0
  %375 = vmatpush1.msra.mxu0 0.0
  %376 = vmatprep.subr.mxu0 0.0
  %377 = vmatpush1.msra.mxu0 0.0
  %378 = vmatprep.subr.mxu0 0.0
  %379 = vmatpush1.msra.mxu0 0.0
  %380 = vmatprep.subr.mxu0 0.0
  %381 = vmatpush1.msra.mxu0 0.0
  %382 = vmatprep.subr.mxu0 0.0
  %383 = vmatpush1.msra.mxu0 0.0
  %384 = vmatprep.subr.mxu0 0.0
  %385 = vmatpush1.msra.mxu0 0.0
  %386 = vmatprep.subr.mxu0 0.0
  %387 = vmatpush1.msra.mxu0 0.0
  %388 = vmatprep.subr.mxu0 0.0
  %389 = vmatpush1.msra.mxu0 0.0
  %390 = vmatprep.subr.mxu0 0.0
  %391 = vmatpush1.msra.mxu0 0.0
  %392 = vmatprep.subr.mxu0 0.0
  %393 = vmatpush1.msra.mxu0 0.0
  %394 = vmatprep.subr.mxu0 0.0
  %395 = vmatpush1.msra.mxu0 0.0
  %396 = vmatprep.mubr.f32.mxu0 0.0
  %397 = vmatmul.mubr.f32.gmra.mrb[0].mxu0 %v285
  %v398 = vpop.f32.mrb[0].mxu0
  %v399 = vadd.f32 %v281, %v398
  %v400 = vpop.f32.mrb[0].mxu0
  %401 = vmatprep.mubr.f32.mxu0 0.0
  %402 = vmatmul.mubr.f32.gmra.mrb[0].mxu0 %v288
  %v403 = vpop.f32.mrb[0].mxu0
  %v404 = vadd.f32 %v281, %v403
  %v405 = vpop.f32.mrb[0].mxu0
  %406 = vmatprep.mubr.f32.mxu0 0.0
  %407 = vmatmul.mubr.f32.gmra.mrb[0].mxu0 %v291
  %v408 = vpop.f32.mrb[0].mxu0
  %v409 = vadd.f32 %v281, %v408
  %v410 = vpop.f32.mrb[0].mxu0
  %411 = vmatprep.mubr.f32.mxu0 0.0
  %412 = vmatmul.mubr.f32.gmra.mrb[0].mxu0 %v294
  %v413 = vpop.f32.mrb[0].mxu0
  %v414 = vadd.f32 %v281, %v413
  %v415 = vpop.f32.mrb[0].mxu0
  %416 = vmatprep.mubr.f32.mxu0 0.0
  %417 = vmatmul.mubr.f32.gmra.mrb[0].mxu0 %v297
  %v418 = vpop.f32.mrb[0].mxu0
  %v419 = vadd.f32 %v281, %v418
  %v420 = vpop.f32.mrb[0].mxu0
  %421 = vmatprep.mubr.f32.mxu0 0.0
  %422 = vmatmul.mubr.f32.gmra.mrb[0].mxu0 %v300
  %v423 = vpop.f32.mrb[0].mxu0
  %v424 = vadd.f32 %v281, %v423
  %v425 = vpop.f32.mrb[0].mxu0
  %426 = vmatprep.mubr.f32.mxu0 0.0
  %427 = vmatmul.mubr.f32.gmra.mrb[0].mxu0 %v303
  %v428 = vpop.f32.mrb[0].mxu0
  %v429 = vadd.f32 %v281, %v428
  %v430 = vpop.f32.mrb[0].mxu0
  %431 = vmatprep.mubr.f32.mxu0 0.0
  %432 = vmatmul.mubr.f32.gmra.mrb[0].mxu0 %v306
  %v433 = vpop.f32.mrb[0].mxu0
  %v434 = vadd.f32 %v281, %v433
  %v435 = vpop.f32.mrb[0].mxu0
  %436 = vmatprep.mubr.f32.mxu0 0.0
  %437 = vmatmul.mubr.f32.gmra.mrb[0].mxu0 %v309
  %v438 = vpop.f32.mrb[0].mxu0
  %v439 = vadd.f32 %v281, %v438
  %v440 = vpop.f32.mrb[0].mxu0
  %441 = vmatprep.mubr.f32.mxu0 0.0
  %442 = vmatmul.mubr.f32.gmra.mrb[0].mxu0 %v312
  %v443 = vpop.f32.mrb[0].mxu0
  %v444 = vadd.f32 %v281, %v443
  %v445 = vpop.f32.mrb[0].mxu0
  %446 = vmatprep.mubr.f32.mxu0 0.0
  %447 = vmatmul.mubr.f32.gmra.mrb[0].mxu0 %v315
  %v448 = vpop.f32.mrb[0].mxu0
  %v449 = vadd.f32 %v281, %v448
  %v450 = vpop.f32.mrb[0].mxu0
  %451 = vmatprep.mubr.f32.mxu0 0.0
  %452 = vmatmul.mubr.f32.gmra.mrb[0].mxu0 %v318
  %v453 = vpop.f32.mrb[0].mxu0
  %v454 = vadd.f32 %v281, %v453
  %v455 = vpop.f32.mrb[0].mxu0
  %456 = vmatprep.mubr.f32.mxu0 0.0
  %457 = vmatmul.mubr.f32.gmra.mrb[0].mxu0 %v321
  %v458 = vpop.f32.mrb[0].mxu0
  %v459 = vadd.f32 %v281, %v458
  %v460 = vpop.f32.mrb[0].mxu0
  %461 = vmatprep.mubr.f32.mxu0 0.0
  %462 = vmatmul.mubr.f32.gmra.mrb[0].mxu0 %v324
  %v463 = vpop.f32.mrb[0].mxu0
  %v464 = vadd.f32 %v281, %v463
  %v465 = vpop.f32.mrb[0].mxu0
  %466 = vmatprep.mubr.f32.mxu0 0.0
  %467 = vmatmul.mubr.f32.gmra.mrb[0].mxu0 %v327
  %v468 = vpop.f32.mrb[0].mxu0
  %v469 = vadd.f32 %v281, %v468
  %v470 = vpop.f32.mrb[0].mxu0
  %471 = vmatprep.mubr.f32.mxu0 0.0
  %472 = vmatmul.mubr.f32.gmra.mrb[0].mxu0 %v330
  %v473 = vpop.f32.mrb[0].mxu0
  %v474 = vadd.f32 %v281, %v473
  %v475 = vpop.f32.mrb[0].mxu0
  %476 = vdwg.mxu0
  %493 = vrot.lane.b32.xlu0 %v399, 1
  %v494 = vpop.permute.xlu0 %493
  %495 = vrot.lane.b32.xlu0 %v404, 1
  %v496 = vpop.permute.xlu0 %495
  %497 = vrot.lane.b32.xlu0 %v409, 1
  %v498 = vpop.permute.xlu0 %497
  %499 = vrot.lane.b32.xlu0 %v414, 1
  %v500 = vpop.permute.xlu0 %499
  %501 = vrot.lane.b32.xlu0 %v419, 1
  %v502 = vpop.permute.xlu0 %501
  %503 = vrot.lane.b32.xlu0 %v424, 1
  %v504 = vpop.permute.xlu0 %503
  %505 = vrot.lane.b32.xlu0 %v429, 1
  %v506 = vpop.permute.xlu0 %505
  %507 = vrot.lane.b32.xlu0 %v434, 1
  %v508 = vpop.permute.xlu0 %507
  %509 = vrot.lane.b32.xlu0 %v439, 1
  %v510 = vpop.permute.xlu0 %509
  %511 = vrot.lane.b32.xlu0 %v444, 1
  %v512 = vpop.permute.xlu0 %511
  %513 = vrot.lane.b32.xlu0 %v449, 1
  %v514 = vpop.permute.xlu0 %513
  %515 = vrot.lane.b32.xlu0 %v454, 1
  %v516 = vpop.permute.xlu0 %515
  %517 = vrot.lane.b32.xlu0 %v459, 1
  %v518 = vpop.permute.xlu0 %517
  %519 = vrot.lane.b32.xlu0 %v464, 1
  %v520 = vpop.permute.xlu0 %519
  %521 = vrot.lane.b32.xlu0 %v469, 1
  %v522 = vpop.permute.xlu0 %521
  %523 = vrot.lane.b32.xlu0 %v474, 1
  %v524 = vpop.permute.xlu0 %523
  %v541 = vsub.f32 %v399, %v494
  %v542 = vsub.f32 %v404, %v496
  %v543 = vsub.f32 %v409, %v498
  %v544 = vsub.f32 %v414, %v500
  %v545 = vsub.f32 %v419, %v502
  %v546 = vsub.f32 %v424, %v504
  %v547 = vsub.f32 %v429, %v506
  %v548 = vsub.f32 %v434, %v508
  %v549 = vsub.f32 %v439, %v510
  %v550 = vsub.f32 %v444, %v512
  %v551 = vsub.f32 %v449, %v514
  %v552 = vsub.f32 %v454, %v516
  %v553 = vsub.f32 %v459, %v518
  %v554 = vsub.f32 %v464, %v520
  %v555 = vsub.f32 %v469, %v522
  %v556 = vsub.f32 %v474, %v524
  %v557 = vmul.f32 %v541, 0.5
  %v558 = vmul.f32 %v542, 0.5
  %v559 = vmul.f32 %v543, 0.5
  %v560 = vmul.f32 %v544, 0.5
  %v561 = vmul.f32 %v545, 0.5
  %v562 = vmul.f32 %v546, 0.5
  %v563 = vmul.f32 %v547, 0.5
  %v564 = vmul.f32 %v548, 0.5
  %v565 = vmul.f32 %v549, 0.5
  %v566 = vmul.f32 %v550, 0.5
  %v567 = vmul.f32 %v551, 0.5
  %v568 = vmul.f32 %v552, 0.5
  %v569 = vmul.f32 %v553, 0.5
  %v570 = vmul.f32 %v554, 0.5
  %v571 = vmul.f32 %v555, 0.5
  %v572 = vmul.f32 %v556, 0.5
  %v573 = vtanh.pop %v557
  %v574 = vtanh.pop %v558
  %v575 = vtanh.pop %v559
  %v576 = vtanh.pop %v560
  %v577 = vtanh.pop %v561
  %v578 = vtanh.pop %v562
  %v579 = vtanh.pop %v563
  %v580 = vtanh.pop %v564
  %v581 = vtanh.pop %v565
  %v582 = vtanh.pop %v566
  %v583 = vtanh.pop %v567
  %v584 = vtanh.pop %v568
  %v585 = vtanh.pop %v569
  %v586 = vtanh.pop %v570
  %v587 = vtanh.pop %v571
  %v588 = vtanh.pop %v572
  %v589 = vadd.f32 %v573, 1.0
  %v590 = vadd.f32 %v574, 1.0
  %v591 = vadd.f32 %v575, 1.0
  %v592 = vadd.f32 %v576, 1.0
  %v593 = vadd.f32 %v577, 1.0
  %v594 = vadd.f32 %v578, 1.0
  %v595 = vadd.f32 %v579, 1.0
  %v596 = vadd.f32 %v580, 1.0
  %v597 = vadd.f32 %v581, 1.0
  %v598 = vadd.f32 %v582, 1.0
  %v599 = vadd.f32 %v583, 1.0
  %v600 = vadd.f32 %v584, 1.0
  %v601 = vadd.f32 %v585, 1.0
  %v602 = vadd.f32 %v586, 1.0
  %v603 = vadd.f32 %v587, 1.0
  %v604 = vadd.f32 %v588, 1.0
  %v605 = vmul.f32 %v589, 0.5
  %v606 = vmul.f32 %v590, 0.5
  %v607 = vmul.f32 %v591, 0.5
  %v608 = vmul.f32 %v592, 0.5
  %v609 = vmul.f32 %v593, 0.5
  %v610 = vmul.f32 %v594, 0.5
  %v611 = vmul.f32 %v595, 0.5
  %v612 = vmul.f32 %v596, 0.5
  %v613 = vmul.f32 %v597, 0.5
  %v614 = vmul.f32 %v598, 0.5
  %v615 = vmul.f32 %v599, 0.5
  %v616 = vmul.f32 %v600, 0.5
  %v617 = vmul.f32 %v601, 0.5
  %v618 = vmul.f32 %v602, 0.5
  %v619 = vmul.f32 %v603, 0.5
  %v620 = vmul.f32 %v604, 0.5
  %v621 = vsub.f32 1.0, %v605
  %v622 = vsub.f32 1.0, %v606
  %v623 = vsub.f32 1.0, %v607
  %v624 = vsub.f32 1.0, %v608
  %v625 = vsub.f32 1.0, %v609
  %v626 = vsub.f32 1.0, %v610
  %v627 = vsub.f32 1.0, %v611
  %v628 = vsub.f32 1.0, %v612
  %v629 = vsub.f32 1.0, %v613
  %v630 = vsub.f32 1.0, %v614
  %v631 = vsub.f32 1.0, %v615
  %v632 = vsub.f32 1.0, %v616
  %v633 = vsub.f32 1.0, %v617
  %v634 = vsub.f32 1.0, %v618
  %v635 = vsub.f32 1.0, %v619
  %v636 = vsub.f32 1.0, %v620
  %v637 = vadd.f32 %v605, 1e-08
  %v638 = vadd.f32 %v606, 1e-08
  %v639 = vadd.f32 %v607, 1e-08
  %v640 = vadd.f32 %v608, 1e-08
  %v641 = vadd.f32 %v609, 1e-08
  %v642 = vadd.f32 %v610, 1e-08
  %v643 = vadd.f32 %v611, 1e-08
  %v644 = vadd.f32 %v612, 1e-08
  %v645 = vadd.f32 %v613, 1e-08
  %v646 = vadd.f32 %v614, 1e-08
  %v647 = vadd.f32 %v615, 1e-08
  %v648 = vadd.f32 %v616, 1e-08
  %v649 = vadd.f32 %v617, 1e-08
  %v650 = vadd.f32 %v618, 1e-08
  %v651 = vadd.f32 %v619, 1e-08
  %v652 = vadd.f32 %v620, 1e-08
  %v653 = vlog2.pop %v637
  %v654 = vmul.f32 %v653, 0.6931472
  %v655 = vlog2.pop %v638
  %v656 = vmul.f32 %v655, 0.6931472
  %v657 = vlog2.pop %v639
  %v658 = vmul.f32 %v657, 0.6931472
  %v659 = vlog2.pop %v640
  %v660 = vmul.f32 %v659, 0.6931472
  %v661 = vlog2.pop %v641
  %v662 = vmul.f32 %v661, 0.6931472
  %v663 = vlog2.pop %v642
  %v664 = vmul.f32 %v663, 0.6931472
  %v665 = vlog2.pop %v643
  %v666 = vmul.f32 %v665, 0.6931472
  %v667 = vlog2.pop %v644
  %v668 = vmul.f32 %v667, 0.6931472
  %v669 = vlog2.pop %v645
  %v670 = vmul.f32 %v669, 0.6931472
  %v671 = vlog2.pop %v646
  %v672 = vmul.f32 %v671, 0.6931472
  %v673 = vlog2.pop %v647
  %v674 = vmul.f32 %v673, 0.6931472
  %v675 = vlog2.pop %v648
  %v676 = vmul.f32 %v675, 0.6931472
  %v677 = vlog2.pop %v649
  %v678 = vmul.f32 %v677, 0.6931472
  %v679 = vlog2.pop %v650
  %v680 = vmul.f32 %v679, 0.6931472
  %v681 = vlog2.pop %v651
  %v682 = vmul.f32 %v681, 0.6931472
  %v683 = vlog2.pop %v652
  %v684 = vmul.f32 %v683, 0.6931472
  %v685 = vmul.f32 %v605, %v654
  %v686 = vmul.f32 %v606, %v656
  %v687 = vmul.f32 %v607, %v658
  %v688 = vmul.f32 %v608, %v660
  %v689 = vmul.f32 %v609, %v662
  %v690 = vmul.f32 %v610, %v664
  %v691 = vmul.f32 %v611, %v666
  %v692 = vmul.f32 %v612, %v668
  %v693 = vmul.f32 %v613, %v670
  %v694 = vmul.f32 %v614, %v672
  %v695 = vmul.f32 %v615, %v674
  %v696 = vmul.f32 %v616, %v676
  %v697 = vmul.f32 %v617, %v678
  %v698 = vmul.f32 %v618, %v680
  %v699 = vmul.f32 %v619, %v682
  %v700 = vmul.f32 %v620, %v684
  %v701 = vadd.f32 %v621, 1e-08
  %v702 = vadd.f32 %v622, 1e-08
  %v703 = vadd.f32 %v623, 1e-08
  %v704 = vadd.f32 %v624, 1e-08
  %v705 = vadd.f32 %v625, 1e-08
  %v706 = vadd.f32 %v626, 1e-08
  %v707 = vadd.f32 %v627, 1e-08
  %v708 = vadd.f32 %v628, 1e-08
  %v709 = vadd.f32 %v629, 1e-08
  %v710 = vadd.f32 %v630, 1e-08
  %v711 = vadd.f32 %v631, 1e-08
  %v712 = vadd.f32 %v632, 1e-08
  %v713 = vadd.f32 %v633, 1e-08
  %v714 = vadd.f32 %v634, 1e-08
  %v715 = vadd.f32 %v635, 1e-08
  %v716 = vadd.f32 %v636, 1e-08
  %v717 = vlog2.pop %v701
  %v718 = vmul.f32 %v717, 0.6931472
  %v719 = vlog2.pop %v702
  %v720 = vmul.f32 %v719, 0.6931472
  %v721 = vlog2.pop %v703
  %v722 = vmul.f32 %v721, 0.6931472
  %v723 = vlog2.pop %v704
  %v724 = vmul.f32 %v723, 0.6931472
  %v725 = vlog2.pop %v705
  %v726 = vmul.f32 %v725, 0.6931472
  %v727 = vlog2.pop %v706
  %v728 = vmul.f32 %v727, 0.6931472
  %v729 = vlog2.pop %v707
  %v730 = vmul.f32 %v729, 0.6931472
  %v731 = vlog2.pop %v708
  %v732 = vmul.f32 %v731, 0.6931472
  %v733 = vlog2.pop %v709
  %v734 = vmul.f32 %v733, 0.6931472
  %v735 = vlog2.pop %v710
  %v736 = vmul.f32 %v735, 0.6931472
  %v737 = vlog2.pop %v711
  %v738 = vmul.f32 %v737, 0.6931472
  %v739 = vlog2.pop %v712
  %v740 = vmul.f32 %v739, 0.6931472
  %v741 = vlog2.pop %v713
  %v742 = vmul.f32 %v741, 0.6931472
  %v743 = vlog2.pop %v714
  %v744 = vmul.f32 %v743, 0.6931472
  %v745 = vlog2.pop %v715
  %v746 = vmul.f32 %v745, 0.6931472
  %v747 = vlog2.pop %v716
  %v748 = vmul.f32 %v747, 0.6931472
  %v749 = vmul.f32 %v621, %v718
  %v750 = vmul.f32 %v622, %v720
  %v751 = vmul.f32 %v623, %v722
  %v752 = vmul.f32 %v624, %v724
  %v753 = vmul.f32 %v625, %v726
  %v754 = vmul.f32 %v626, %v728
  %v755 = vmul.f32 %v627, %v730
  %v756 = vmul.f32 %v628, %v732
  %v757 = vmul.f32 %v629, %v734
  %v758 = vmul.f32 %v630, %v736
  %v759 = vmul.f32 %v631, %v738
  %v760 = vmul.f32 %v632, %v740
  %v761 = vmul.f32 %v633, %v742
  %v762 = vmul.f32 %v634, %v744
  %v763 = vmul.f32 %v635, %v746
  %v764 = vmul.f32 %v636, %v748
  %v765 = vadd.f32 %v685, %v749
  %v766 = vadd.f32 %v686, %v750
  %v767 = vadd.f32 %v687, %v751
  %v768 = vadd.f32 %v688, %v752
  %v769 = vadd.f32 %v689, %v753
  %v770 = vadd.f32 %v690, %v754
  %v771 = vadd.f32 %v691, %v755
  %v772 = vadd.f32 %v692, %v756
  %v773 = vadd.f32 %v693, %v757
  %v774 = vadd.f32 %v694, %v758
  %v775 = vadd.f32 %v695, %v759
  %v776 = vadd.f32 %v696, %v760
  %v777 = vadd.f32 %v697, %v761
  %v778 = vadd.f32 %v698, %v762
  %v779 = vadd.f32 %v699, %v763
  %v780 = vadd.f32 %v700, %v764
  %v781 = vlaneseq
  %v782 = vand.u32 %v781, 127
  %vm783 = vcmp.lt.s32.totalorder %v782, 12
  %v784 = vsel %vm783, 1, 0
  %vm785 = vcmp.eq.s32.totalorder %v784, 1
  %802 = vset.pattern.permute.xlu0 1
  %803 = vperm.xlu0 %802, %v765
  %v804 = vpop.permute.xlu0 %803
  %805 = vset.pattern.permute.xlu0 1
  %806 = vperm.xlu0 %805, %v766
  %v807 = vpop.permute.xlu0 %806
  %808 = vset.pattern.permute.xlu0 1
  %809 = vperm.xlu0 %808, %v767
  %v810 = vpop.permute.xlu0 %809
  %811 = vset.pattern.permute.xlu0 1
  %812 = vperm.xlu0 %811, %v768
  %v813 = vpop.permute.xlu0 %812
  %814 = vset.pattern.permute.xlu0 1
  %815 = vperm.xlu0 %814, %v769
  %v816 = vpop.permute.xlu0 %815
  %817 = vset.pattern.permute.xlu0 1
  %818 = vperm.xlu0 %817, %v770
  %v819 = vpop.permute.xlu0 %818
  %820 = vset.pattern.permute.xlu0 1
  %821 = vperm.xlu0 %820, %v771
  %v822 = vpop.permute.xlu0 %821
  %823 = vset.pattern.permute.xlu0 1
  %824 = vperm.xlu0 %823, %v772
  %v825 = vpop.permute.xlu0 %824
  %826 = vset.pattern.permute.xlu0 1
  %827 = vperm.xlu0 %826, %v773
  %v828 = vpop.permute.xlu0 %827
  %829 = vset.pattern.permute.xlu0 1
  %830 = vperm.xlu0 %829, %v774
  %v831 = vpop.permute.xlu0 %830
  %832 = vset.pattern.permute.xlu0 1
  %833 = vperm.xlu0 %832, %v775
  %v834 = vpop.permute.xlu0 %833
  %835 = vset.pattern.permute.xlu0 1
  %836 = vperm.xlu0 %835, %v776
  %v837 = vpop.permute.xlu0 %836
  %838 = vset.pattern.permute.xlu0 1
  %839 = vperm.xlu0 %838, %v777
  %v840 = vpop.permute.xlu0 %839
  %841 = vset.pattern.permute.xlu0 1
  %842 = vperm.xlu0 %841, %v778
  %v843 = vpop.permute.xlu0 %842
  %844 = vset.pattern.permute.xlu0 1
  %845 = vperm.xlu0 %844, %v779
  %v846 = vpop.permute.xlu0 %845
  %847 = vset.pattern.permute.xlu0 1
  %848 = vperm.xlu0 %847, %v780
  %v849 = vpop.permute.xlu0 %848
  %v850 = vlaneseq
  %v851 = vshrl.u32 %v850, 7
  %v852 = vsub.s32 %v782, %v851
  %v853 = vrot.slane %v804, %v852
  %v854 = vadd.s32 %v782, 4294967288
  %v855 = vlaneseq
  %v856 = vshrl.u32 %v855, 7
  %v857 = vsub.s32 %v854, %v856
  %v858 = vrot.slane %v807, %v857
  %vm859 = vcmask 130112
  %v860 = vsel %vm859, %v858, %v853
  %v861 = vlaneseq
  %v862 = vshrl.u32 %v861, 7
  %v863 = vsub.s32 %v782, %v862
  %v864 = vrot.slane %v810, %v863
  %v865 = vlaneseq
  %v866 = vshrl.u32 %v865, 7
  %v867 = vsub.s32 %v854, %v866
  %v868 = vrot.slane %v813, %v867
  %v869 = vsel %vm859, %v868, %v864
  %v870 = vlaneseq
  %v871 = vshrl.u32 %v870, 7
  %v872 = vsub.s32 %v782, %v871
  %v873 = vrot.slane %v816, %v872
  %v874 = vlaneseq
  %v875 = vshrl.u32 %v874, 7
  %v876 = vsub.s32 %v854, %v875
  %v877 = vrot.slane %v819, %v876
  %v878 = vsel %vm859, %v877, %v873
  %v879 = vlaneseq
  %v880 = vshrl.u32 %v879, 7
  %v881 = vsub.s32 %v782, %v880
  %v882 = vrot.slane %v822, %v881
  %v883 = vlaneseq
  %v884 = vshrl.u32 %v883, 7
  %v885 = vsub.s32 %v854, %v884
  %v886 = vrot.slane %v825, %v885
  %v887 = vsel %vm859, %v886, %v882
  %v888 = vlaneseq
  %v889 = vshrl.u32 %v888, 7
  %v890 = vsub.s32 %v782, %v889
  %v891 = vrot.slane %v828, %v890
  %v892 = vlaneseq
  %v893 = vshrl.u32 %v892, 7
  %v894 = vsub.s32 %v854, %v893
  %v895 = vrot.slane %v831, %v894
  %v896 = vsel %vm859, %v895, %v891
  %v897 = vlaneseq
  %v898 = vshrl.u32 %v897, 7
  %v899 = vsub.s32 %v782, %v898
  %v900 = vrot.slane %v834, %v899
  %v901 = vlaneseq
  %v902 = vshrl.u32 %v901, 7
  %v903 = vsub.s32 %v854, %v902
  %v904 = vrot.slane %v837, %v903
  %v905 = vsel %vm859, %v904, %v900
  %v906 = vlaneseq
  %v907 = vshrl.u32 %v906, 7
  %v908 = vsub.s32 %v782, %v907
  %v909 = vrot.slane %v840, %v908
  %v910 = vlaneseq
  %v911 = vshrl.u32 %v910, 7
  %v912 = vsub.s32 %v854, %v911
  %v913 = vrot.slane %v843, %v912
  %v914 = vsel %vm859, %v913, %v909
  %v915 = vlaneseq
  %v916 = vshrl.u32 %v915, 7
  %v917 = vsub.s32 %v782, %v916
  %v918 = vrot.slane %v846, %v917
  %v919 = vlaneseq
  %v920 = vshrl.u32 %v919, 7
  %v921 = vsub.s32 %v854, %v920
  %v922 = vrot.slane %v849, %v921
  %v923 = vsel %vm859, %v922, %v918
  %vm924 = vcmask 1041409
  %v925 = vsel %vm924, %v869, %v860
  %vm926 = vcmask 1042434
  %v927 = vsel %vm926, %v878, %v925
  %vm928 = vcmask 1043459
  %v929 = vsel %vm928, %v887, %v927
  %vm930 = vcmask 1044484
  %v931 = vsel %vm930, %v896, %v929
  %vm932 = vcmask 1045509
  %v933 = vsel %vm932, %v905, %v931
  %vm934 = vcmask 1046534
  %v935 = vsel %vm934, %v914, %v933
  %vm936 = vcmask 1047559
  %v937 = vsel %vm936, %v923, %v935
  %v939 = vsel %vm785, %v937, 0.0
  %v940 = vsel %vm62, %v939, 0.0
  %941 = vadd.xlane.f32.xlu0 %v940
  %v942 = vpop.xlane.xlu0 %941
  %vm943 = vcmask 7168
  %944 = vst.msk [vmem:[%s11] sm:$0xff] %vm943, %v942
  %946 = vset.pattern.permute.xlu0 1
  %947 = vperm.xlu0 %946, %v605
  %v948 = vpop.permute.xlu0 %947
  %951 = vset.pattern.permute.xlu0 1
  %952 = vperm.xlu0 %951, %v606
  %v953 = vpop.permute.xlu0 %952
  %956 = vset.pattern.permute.xlu0 1
  %957 = vperm.xlu0 %956, %v607
  %v958 = vpop.permute.xlu0 %957
  %961 = vset.pattern.permute.xlu0 1
  %962 = vperm.xlu0 %961, %v608
  %v963 = vpop.permute.xlu0 %962
  %966 = vset.pattern.permute.xlu0 1
  %967 = vperm.xlu0 %966, %v609
  %v968 = vpop.permute.xlu0 %967
  %971 = vset.pattern.permute.xlu0 1
  %972 = vperm.xlu0 %971, %v610
  %v973 = vpop.permute.xlu0 %972
  %976 = vset.pattern.permute.xlu0 1
  %977 = vperm.xlu0 %976, %v611
  %v978 = vpop.permute.xlu0 %977
  %981 = vset.pattern.permute.xlu0 1
  %982 = vperm.xlu0 %981, %v612
  %v983 = vpop.permute.xlu0 %982
  %986 = vset.pattern.permute.xlu0 1
  %987 = vperm.xlu0 %986, %v613
  %v988 = vpop.permute.xlu0 %987
  %991 = vset.pattern.permute.xlu0 1
  %992 = vperm.xlu0 %991, %v614
  %v993 = vpop.permute.xlu0 %992
  %996 = vset.pattern.permute.xlu0 1
  %997 = vperm.xlu0 %996, %v615
  %v998 = vpop.permute.xlu0 %997
  %1001 = vset.pattern.permute.xlu0 1
  %1002 = vperm.xlu0 %1001, %v616
  %v1003 = vpop.permute.xlu0 %1002
  %1006 = vset.pattern.permute.xlu0 1
  %1007 = vperm.xlu0 %1006, %v617
  %v1008 = vpop.permute.xlu0 %1007
  %1011 = vset.pattern.permute.xlu0 1
  %1012 = vperm.xlu0 %1011, %v618
  %v1013 = vpop.permute.xlu0 %1012
  %1016 = vset.pattern.permute.xlu0 1
  %1017 = vperm.xlu0 %1016, %v619
  %v1018 = vpop.permute.xlu0 %1017
  %1021 = vset.pattern.permute.xlu0 1
  %1022 = vperm.xlu0 %1021, %v620
  %v1023 = vpop.permute.xlu0 %1022
  %v1025 = vmul.f32 %v37, %v948
  %v1026 = vmul.f32 %v38, %v953
  %v1027 = vmul.f32 %v39, %v958
  %v1028 = vmul.f32 %v40, %v963
  %v1029 = vmul.f32 %v41, %v968
  %v1030 = vmul.f32 %v42, %v973
  %v1031 = vmul.f32 %v43, %v978
  %v1032 = vmul.f32 %v44, %v983
  %v1033 = vmul.f32 %v45, %v988
  %v1034 = vmul.f32 %v46, %v993
  %v1035 = vmul.f32 %v47, %v998
  %v1036 = vmul.f32 %v48, %v1003
  %v1037 = vmul.f32 %v49, %v1008
  %v1038 = vmul.f32 %v50, %v1013
  %v1039 = vmul.f32 %v51, %v1018
  %v1040 = vmul.f32 %v52, %v1023
  %v1041 = vld [vmem:[%s5] sm:$0xff]
  %v1042 = vld [vmem:[%s5 + $0x8] sm:$0xff]
  %v1044 = vsel %vm62, %v1025, 0
  %v1047 = vsel %vm62, %v1026, 0
  %v1050 = vsel %vm62, %v1027, 0
  %v1053 = vsel %vm62, %v1028, 0
  %v1056 = vsel %vm62, %v1029, 0
  %v1059 = vsel %vm62, %v1030, 0
  %v1062 = vsel %vm62, %v1031, 0
  %v1065 = vsel %vm62, %v1032, 0
  %v1068 = vsel %vm62, %v1033, 0
  %v1071 = vsel %vm62, %v1034, 0
  %v1074 = vsel %vm62, %v1035, 0
  %v1077 = vsel %vm62, %v1036, 0
  %v1080 = vsel %vm62, %v1037, 0
  %v1083 = vsel %vm62, %v1038, 0
  %v1086 = vsel %vm62, %v1039, 0
  %v1089 = vsel %vm62, %v1040, 0
  %1091 = vmatprep.subr.mxu0 0.0
  %1092 = vmatpush1.msra.mxu0 %v1041
  %1093 = vmatprep.subr.mxu0 0.0
  %1094 = vmatpush1.msra.mxu0 %v1042
  %1095 = vmatprep.subr.mxu0 0.0
  %1096 = vmatpush1.msra.mxu0 0.0
  %1097 = vmatprep.subr.mxu0 0.0
  %1098 = vmatpush1.msra.mxu0 0.0
  %1099 = vmatprep.subr.mxu0 0.0
  %1100 = vmatpush1.msra.mxu0 0.0
  %1101 = vmatprep.subr.mxu0 0.0
  %1102 = vmatpush1.msra.mxu0 0.0
  %1103 = vmatprep.subr.mxu0 0.0
  %1104 = vmatpush1.msra.mxu0 0.0
  %1105 = vmatprep.subr.mxu0 0.0
  %1106 = vmatpush1.msra.mxu0 0.0
  %1107 = vmatprep.subr.mxu0 0.0
  %1108 = vmatpush1.msra.mxu0 0.0
  %1109 = vmatprep.subr.mxu0 0.0
  %1110 = vmatpush1.msra.mxu0 0.0
  %1111 = vmatprep.subr.mxu0 0.0
  %1112 = vmatpush1.msra.mxu0 0.0
  %1113 = vmatprep.subr.mxu0 0.0
  %1114 = vmatpush1.msra.mxu0 0.0
  %1115 = vmatprep.subr.mxu0 0.0
  %1116 = vmatpush1.msra.mxu0 0.0
  %1117 = vmatprep.subr.mxu0 0.0
  %1118 = vmatpush1.msra.mxu0 0.0
  %1119 = vmatprep.subr.mxu0 0.0
  %1120 = vmatpush1.msra.mxu0 0.0
  %1121 = vmatprep.subr.mxu0 0.0
  %1122 = vmatpush1.msra.mxu0 0.0
  %1123 = vmatprep.subr.mxu0 0.0
  %1124 = vmatpush1.msra.mxu0 0.0
  %1125 = vmatprep.subr.mxu0 0.0
  %1126 = vmatpush1.msra.mxu0 0.0
  %1127 = vmatprep.subr.mxu0 0.0
  %1128 = vmatpush1.msra.mxu0 0.0
  %1129 = vmatprep.subr.mxu0 0.0
  %1130 = vmatpush1.msra.mxu0 0.0
  %1131 = vmatprep.subr.mxu0 0.0
  %1132 = vmatpush1.msra.mxu0 0.0
  %1133 = vmatprep.subr.mxu0 0.0
  %1134 = vmatpush1.msra.mxu0 0.0
  %1135 = vmatprep.subr.mxu0 0.0
  %1136 = vmatpush1.msra.mxu0 0.0
  %1137 = vmatprep.subr.mxu0 0.0
  %1138 = vmatpush1.msra.mxu0 0.0
  %1139 = vmatprep.subr.mxu0 0.0
  %1140 = vmatpush1.msra.mxu0 0.0
  %1141 = vmatprep.subr.mxu0 0.0
  %1142 = vmatpush1.msra.mxu0 0.0
  %1143 = vmatprep.subr.mxu0 0.0
  %1144 = vmatpush1.msra.mxu0 0.0
  %1145 = vmatprep.subr.mxu0 0.0
  %1146 = vmatpush1.msra.mxu0 0.0
  %1147 = vmatprep.subr.mxu0 0.0
  %1148 = vmatpush1.msra.mxu0 0.0
  %1149 = vmatprep.subr.mxu0 0.0
  %1150 = vmatpush1.msra.mxu0 0.0
  %1151 = vmatprep.subr.mxu0 0.0
  %1152 = vmatpush1.msra.mxu0 0.0
  %1153 = vmatprep.subr.mxu0 0.0
  %1154 = vmatpush1.msra.mxu0 0.0
  %1155 = vmatprep.mubr.f32.mxu0 0.0
  %1156 = vmatmul.mubr.f32.gmra.mrb[0].mxu0 %v1044
  %v1157 = vpop.f32.mrb[0].mxu0
  %v1158 = vadd.f32 0.0, %v1157
  %v1159 = vpop.f32.mrb[0].mxu0
  %1160 = vmatprep.mubr.f32.mxu0 0.0
  %1161 = vmatmul.mubr.f32.gmra.mrb[0].mxu0 %v1047
  %v1162 = vpop.f32.mrb[0].mxu0
  %v1163 = vadd.f32 0.0, %v1162
  %v1164 = vpop.f32.mrb[0].mxu0
  %1165 = vmatprep.mubr.f32.mxu0 0.0
  %1166 = vmatmul.mubr.f32.gmra.mrb[0].mxu0 %v1050
  %v1167 = vpop.f32.mrb[0].mxu0
  %v1168 = vadd.f32 0.0, %v1167
  %v1169 = vpop.f32.mrb[0].mxu0
  %1170 = vmatprep.mubr.f32.mxu0 0.0
  %1171 = vmatmul.mubr.f32.gmra.mrb[0].mxu0 %v1053
  %v1172 = vpop.f32.mrb[0].mxu0
  %v1173 = vadd.f32 0.0, %v1172
  %v1174 = vpop.f32.mrb[0].mxu0
  %1175 = vmatprep.mubr.f32.mxu0 0.0
  %1176 = vmatmul.mubr.f32.gmra.mrb[0].mxu0 %v1056
  %v1177 = vpop.f32.mrb[0].mxu0
  %v1178 = vadd.f32 0.0, %v1177
  %v1179 = vpop.f32.mrb[0].mxu0
  %1180 = vmatprep.mubr.f32.mxu0 0.0
  %1181 = vmatmul.mubr.f32.gmra.mrb[0].mxu0 %v1059
  %v1182 = vpop.f32.mrb[0].mxu0
  %v1183 = vadd.f32 0.0, %v1182
  %v1184 = vpop.f32.mrb[0].mxu0
  %1185 = vmatprep.mubr.f32.mxu0 0.0
  %1186 = vmatmul.mubr.f32.gmra.mrb[0].mxu0 %v1062
  %v1187 = vpop.f32.mrb[0].mxu0
  %v1188 = vadd.f32 0.0, %v1187
  %v1189 = vpop.f32.mrb[0].mxu0
  %1190 = vmatprep.mubr.f32.mxu0 0.0
  %1191 = vmatmul.mubr.f32.gmra.mrb[0].mxu0 %v1065
  %v1192 = vpop.f32.mrb[0].mxu0
  %v1193 = vadd.f32 0.0, %v1192
  %v1194 = vpop.f32.mrb[0].mxu0
  %1195 = vmatprep.mubr.f32.mxu0 0.0
  %1196 = vmatmul.mubr.f32.gmra.mrb[0].mxu0 %v1068
  %v1197 = vpop.f32.mrb[0].mxu0
  %v1198 = vadd.f32 0.0, %v1197
  %v1199 = vpop.f32.mrb[0].mxu0
  %1200 = vmatprep.mubr.f32.mxu0 0.0
  %1201 = vmatmul.mubr.f32.gmra.mrb[0].mxu0 %v1071
  %v1202 = vpop.f32.mrb[0].mxu0
  %v1203 = vadd.f32 0.0, %v1202
  %v1204 = vpop.f32.mrb[0].mxu0
  %1205 = vmatprep.mubr.f32.mxu0 0.0
  %1206 = vmatmul.mubr.f32.gmra.mrb[0].mxu0 %v1074
  %v1207 = vpop.f32.mrb[0].mxu0
  %v1208 = vadd.f32 0.0, %v1207
  %v1209 = vpop.f32.mrb[0].mxu0
  %1210 = vmatprep.mubr.f32.mxu0 0.0
  %1211 = vmatmul.mubr.f32.gmra.mrb[0].mxu0 %v1077
  %v1212 = vpop.f32.mrb[0].mxu0
  %v1213 = vadd.f32 0.0, %v1212
  %v1214 = vpop.f32.mrb[0].mxu0
  %1215 = vmatprep.mubr.f32.mxu0 0.0
  %1216 = vmatmul.mubr.f32.gmra.mrb[0].mxu0 %v1080
  %v1217 = vpop.f32.mrb[0].mxu0
  %v1218 = vadd.f32 0.0, %v1217
  %v1219 = vpop.f32.mrb[0].mxu0
  %1220 = vmatprep.mubr.f32.mxu0 0.0
  %1221 = vmatmul.mubr.f32.gmra.mrb[0].mxu0 %v1083
  %v1222 = vpop.f32.mrb[0].mxu0
  %v1223 = vadd.f32 0.0, %v1222
  %v1224 = vpop.f32.mrb[0].mxu0
  %1225 = vmatprep.mubr.f32.mxu0 0.0
  %1226 = vmatmul.mubr.f32.gmra.mrb[0].mxu0 %v1086
  %v1227 = vpop.f32.mrb[0].mxu0
  %v1228 = vadd.f32 0.0, %v1227
  %v1229 = vpop.f32.mrb[0].mxu0
  %1230 = vmatprep.mubr.f32.mxu0 0.0
  %1231 = vmatmul.mubr.f32.gmra.mrb[0].mxu0 %v1089
  %v1232 = vpop.f32.mrb[0].mxu0
  %v1233 = vadd.f32 0.0, %v1232
  %v1234 = vpop.f32.mrb[0].mxu0
  %1235 = vdwg.mxu0
  %vm1252 = vcmask 1046528
  %v1253 = vrot.slane %v1158, 1
  %v1254 = vrot.slane %v1163, 1
  %v1255 = vsel %vm1252, %v1253, %v1254
  %v1256 = vrot.slane %v1168, 1
  %v1257 = vrot.slane %v1173, 1
  %v1258 = vsel %vm1252, %v1256, %v1257
  %v1259 = vrot.slane %v1178, 1
  %v1260 = vrot.slane %v1183, 1
  %v1261 = vsel %vm1252, %v1259, %v1260
  %v1262 = vrot.slane %v1188, 1
  %v1263 = vrot.slane %v1193, 1
  %v1264 = vsel %vm1252, %v1262, %v1263
  %v1265 = vrot.slane %v1198, 1
  %v1266 = vrot.slane %v1203, 1
  %v1267 = vsel %vm1252, %v1265, %v1266
  %v1268 = vrot.slane %v1208, 1
  %v1269 = vrot.slane %v1213, 1
  %v1270 = vsel %vm1252, %v1268, %v1269
  %v1271 = vrot.slane %v1218, 1
  %v1272 = vrot.slane %v1223, 1
  %v1273 = vsel %vm1252, %v1271, %v1272
  %v1274 = vrot.slane %v1228, 1
  %v1275 = vrot.slane %v1233, 1
  %v1276 = vsel %vm1252, %v1274, %v1275
  %1277 = vrot.lane.b32.xlu0 %v1255, 104
  %v1278 = vpop.permute.xlu0 %1277
  %1279 = vrot.lane.b32.xlu0 %v1254, 104
  %v1280 = vpop.permute.xlu0 %1279
  %1281 = vrot.lane.b32.xlu0 %v1258, 104
  %v1282 = vpop.permute.xlu0 %1281
  %1283 = vrot.lane.b32.xlu0 %v1257, 104
  %v1284 = vpop.permute.xlu0 %1283
  %1285 = vrot.lane.b32.xlu0 %v1261, 104
  %v1286 = vpop.permute.xlu0 %1285
  %1287 = vrot.lane.b32.xlu0 %v1260, 104
  %v1288 = vpop.permute.xlu0 %1287
  %1289 = vrot.lane.b32.xlu0 %v1264, 104
  %v1290 = vpop.permute.xlu0 %1289
  %1291 = vrot.lane.b32.xlu0 %v1263, 104
  %v1292 = vpop.permute.xlu0 %1291
  %1293 = vrot.lane.b32.xlu0 %v1267, 104
  %v1294 = vpop.permute.xlu0 %1293
  %1295 = vrot.lane.b32.xlu0 %v1266, 104
  %v1296 = vpop.permute.xlu0 %1295
  %1297 = vrot.lane.b32.xlu0 %v1270, 104
  %v1298 = vpop.permute.xlu0 %1297
  %1299 = vrot.lane.b32.xlu0 %v1269, 104
  %v1300 = vpop.permute.xlu0 %1299
  %1301 = vrot.lane.b32.xlu0 %v1273, 104
  %v1302 = vpop.permute.xlu0 %1301
  %1303 = vrot.lane.b32.xlu0 %v1272, 104
  %v1304 = vpop.permute.xlu0 %1303
  %1305 = vrot.lane.b32.xlu0 %v1276, 104
  %v1306 = vpop.permute.xlu0 %1305
  %1307 = vrot.lane.b32.xlu0 %v1275, 104
  %v1308 = vpop.permute.xlu0 %1307
  %v1325 = vadd.f32 %v1158, %v1278
  %v1326 = vadd.f32 %v1163, %v1280
  %v1327 = vadd.f32 %v1168, %v1282
  %v1328 = vadd.f32 %v1173, %v1284
  %v1329 = vadd.f32 %v1178, %v1286
  %v1330 = vadd.f32 %v1183, %v1288
  %v1331 = vadd.f32 %v1188, %v1290
  %v1332 = vadd.f32 %v1193, %v1292
  %v1333 = vadd.f32 %v1198, %v1294
  %v1334 = vadd.f32 %v1203, %v1296
  %v1335 = vadd.f32 %v1208, %v1298
  %v1336 = vadd.f32 %v1213, %v1300
  %v1337 = vadd.f32 %v1218, %v1302
  %v1338 = vadd.f32 %v1223, %v1304
  %v1339 = vadd.f32 %v1228, %v1306
  %v1340 = vadd.f32 %v1233, %v1308
  %vm1341 = vcmask 1045504
  %v1342 = vrot.slane %v1158, 2
  %v1343 = vrot.slane %v1163, 2
  %v1344 = vsel %vm1341, %v1342, %v1343
  %v1345 = vrot.slane %v1168, 2
  %v1346 = vrot.slane %v1173, 2
  %v1347 = vsel %vm1341, %v1345, %v1346
  %v1348 = vrot.slane %v1178, 2
  %v1349 = vrot.slane %v1183, 2
  %v1350 = vsel %vm1341, %v1348, %v1349
  %v1351 = vrot.slane %v1188, 2
  %v1352 = vrot.slane %v1193, 2
  %v1353 = vsel %vm1341, %v1351, %v1352
  %v1354 = vrot.slane %v1198, 2
  %v1355 = vrot.slane %v1203, 2
  %v1356 = vsel %vm1341, %v1354, %v1355
  %v1357 = vrot.slane %v1208, 2
  %v1358 = vrot.slane %v1213, 2
  %v1359 = vsel %vm1341, %v1357, %v1358
  %v1360 = vrot.slane %v1218, 2
  %v1361 = vrot.slane %v1223, 2
  %v1362 = vsel %vm1341, %v1360, %v1361
  %v1363 = vrot.slane %v1228, 2
  %v1364 = vrot.slane %v1233, 2
  %v1365 = vsel %vm1341, %v1363, %v1364
  %1366 = vrot.lane.b32.xlu0 %v1344, 80
  %v1367 = vpop.permute.xlu0 %1366
  %1368 = vrot.lane.b32.xlu0 %v1343, 80
  %v1369 = vpop.permute.xlu0 %1368
  %1370 = vrot.lane.b32.xlu0 %v1347, 80
  %v1371 = vpop.permute.xlu0 %1370
  %1372 = vrot.lane.b32.xlu0 %v1346, 80
  %v1373 = vpop.permute.xlu0 %1372
  %1374 = vrot.lane.b32.xlu0 %v1350, 80
  %v1375 = vpop.permute.xlu0 %1374
  %1376 = vrot.lane.b32.xlu0 %v1349, 80
  %v1377 = vpop.permute.xlu0 %1376
  %1378 = vrot.lane.b32.xlu0 %v1353, 80
  %v1379 = vpop.permute.xlu0 %1378
  %1380 = vrot.lane.b32.xlu0 %v1352, 80
  %v1381 = vpop.permute.xlu0 %1380
  %1382 = vrot.lane.b32.xlu0 %v1356, 80
  %v1383 = vpop.permute.xlu0 %1382
  %1384 = vrot.lane.b32.xlu0 %v1355, 80
  %v1385 = vpop.permute.xlu0 %1384
  %1386 = vrot.lane.b32.xlu0 %v1359, 80
  %v1387 = vpop.permute.xlu0 %1386
  %1388 = vrot.lane.b32.xlu0 %v1358, 80
  %v1389 = vpop.permute.xlu0 %1388
  %1390 = vrot.lane.b32.xlu0 %v1362, 80
  %v1391 = vpop.permute.xlu0 %1390
  %1392 = vrot.lane.b32.xlu0 %v1361, 80
  %v1393 = vpop.permute.xlu0 %1392
  %1394 = vrot.lane.b32.xlu0 %v1365, 80
  %v1395 = vpop.permute.xlu0 %1394
  %1396 = vrot.lane.b32.xlu0 %v1364, 80
  %v1397 = vpop.permute.xlu0 %1396
  %v1414 = vadd.f32 %v1325, %v1367
  %v1415 = vadd.f32 %v1326, %v1369
  %v1416 = vadd.f32 %v1327, %v1371
  %v1417 = vadd.f32 %v1328, %v1373
  %v1418 = vadd.f32 %v1329, %v1375
  %v1419 = vadd.f32 %v1330, %v1377
  %v1420 = vadd.f32 %v1331, %v1379
  %v1421 = vadd.f32 %v1332, %v1381
  %v1422 = vadd.f32 %v1333, %v1383
  %v1423 = vadd.f32 %v1334, %v1385
  %v1424 = vadd.f32 %v1335, %v1387
  %v1425 = vadd.f32 %v1336, %v1389
  %v1426 = vadd.f32 %v1337, %v1391
  %v1427 = vadd.f32 %v1338, %v1393
  %v1428 = vadd.f32 %v1339, %v1395
  %v1429 = vadd.f32 %v1340, %v1397
  %vm1430 = vcmask 1044480
  %v1431 = vrot.slane %v1158, 3
  %v1432 = vrot.slane %v1163, 3
  %v1433 = vsel %vm1430, %v1431, %v1432
  %v1434 = vrot.slane %v1168, 3
  %v1435 = vrot.slane %v1173, 3
  %v1436 = vsel %vm1430, %v1434, %v1435
  %v1437 = vrot.slane %v1178, 3
  %v1438 = vrot.slane %v1183, 3
  %v1439 = vsel %vm1430, %v1437, %v1438
  %v1440 = vrot.slane %v1188, 3
  %v1441 = vrot.slane %v1193, 3
  %v1442 = vsel %vm1430, %v1440, %v1441
  %v1443 = vrot.slane %v1198, 3
  %v1444 = vrot.slane %v1203, 3
  %v1445 = vsel %vm1430, %v1443, %v1444
  %v1446 = vrot.slane %v1208, 3
  %v1447 = vrot.slane %v1213, 3
  %v1448 = vsel %vm1430, %v1446, %v1447
  %v1449 = vrot.slane %v1218, 3
  %v1450 = vrot.slane %v1223, 3
  %v1451 = vsel %vm1430, %v1449, %v1450
  %v1452 = vrot.slane %v1228, 3
  %v1453 = vrot.slane %v1233, 3
  %v1454 = vsel %vm1430, %v1452, %v1453
  %1455 = vrot.lane.b32.xlu0 %v1433, 56
  %v1456 = vpop.permute.xlu0 %1455
  %1457 = vrot.lane.b32.xlu0 %v1432, 56
  %v1458 = vpop.permute.xlu0 %1457
  %1459 = vrot.lane.b32.xlu0 %v1436, 56
  %v1460 = vpop.permute.xlu0 %1459
  %1461 = vrot.lane.b32.xlu0 %v1435, 56
  %v1462 = vpop.permute.xlu0 %1461
  %1463 = vrot.lane.b32.xlu0 %v1439, 56
  %v1464 = vpop.permute.xlu0 %1463
  %1465 = vrot.lane.b32.xlu0 %v1438, 56
  %v1466 = vpop.permute.xlu0 %1465
  %1467 = vrot.lane.b32.xlu0 %v1442, 56
  %v1468 = vpop.permute.xlu0 %1467
  %1469 = vrot.lane.b32.xlu0 %v1441, 56
  %v1470 = vpop.permute.xlu0 %1469
  %1471 = vrot.lane.b32.xlu0 %v1445, 56
  %v1472 = vpop.permute.xlu0 %1471
  %1473 = vrot.lane.b32.xlu0 %v1444, 56
  %v1474 = vpop.permute.xlu0 %1473
  %1475 = vrot.lane.b32.xlu0 %v1448, 56
  %v1476 = vpop.permute.xlu0 %1475
  %1477 = vrot.lane.b32.xlu0 %v1447, 56
  %v1478 = vpop.permute.xlu0 %1477
  %1479 = vrot.lane.b32.xlu0 %v1451, 56
  %v1480 = vpop.permute.xlu0 %1479
  %1481 = vrot.lane.b32.xlu0 %v1450, 56
  %v1482 = vpop.permute.xlu0 %1481
  %1483 = vrot.lane.b32.xlu0 %v1454, 56
  %v1484 = vpop.permute.xlu0 %1483
  %1485 = vrot.lane.b32.xlu0 %v1453, 56
  %v1486 = vpop.permute.xlu0 %1485
  %v1503 = vadd.f32 %v1414, %v1456
  %v1504 = vadd.f32 %v1415, %v1458
  %v1505 = vadd.f32 %v1416, %v1460
  %v1506 = vadd.f32 %v1417, %v1462
  %v1507 = vadd.f32 %v1418, %v1464
  %v1508 = vadd.f32 %v1419, %v1466
  %v1509 = vadd.f32 %v1420, %v1468
  %v1510 = vadd.f32 %v1421, %v1470
  %v1511 = vadd.f32 %v1422, %v1472
  %v1512 = vadd.f32 %v1423, %v1474
  %v1513 = vadd.f32 %v1424, %v1476
  %v1514 = vadd.f32 %v1425, %v1478
  %v1515 = vadd.f32 %v1426, %v1480
  %v1516 = vadd.f32 %v1427, %v1482
  %v1517 = vadd.f32 %v1428, %v1484
  %v1518 = vadd.f32 %v1429, %v1486
  %vm1519 = vcmask 1043456
  %v1520 = vrot.slane %v1158, 4
  %v1521 = vrot.slane %v1163, 4
  %v1522 = vsel %vm1519, %v1520, %v1521
  %v1523 = vrot.slane %v1168, 4
  %v1524 = vrot.slane %v1173, 4
  %v1525 = vsel %vm1519, %v1523, %v1524
  %v1526 = vrot.slane %v1178, 4
  %v1527 = vrot.slane %v1183, 4
  %v1528 = vsel %vm1519, %v1526, %v1527
  %v1529 = vrot.slane %v1188, 4
  %v1530 = vrot.slane %v1193, 4
  %v1531 = vsel %vm1519, %v1529, %v1530
  %v1532 = vrot.slane %v1198, 4
  %v1533 = vrot.slane %v1203, 4
  %v1534 = vsel %vm1519, %v1532, %v1533
  %v1535 = vrot.slane %v1208, 4
  %v1536 = vrot.slane %v1213, 4
  %v1537 = vsel %vm1519, %v1535, %v1536
  %v1538 = vrot.slane %v1218, 4
  %v1539 = vrot.slane %v1223, 4
  %v1540 = vsel %vm1519, %v1538, %v1539
  %v1541 = vrot.slane %v1228, 4
  %v1542 = vrot.slane %v1233, 4
  %v1543 = vsel %vm1519, %v1541, %v1542
  %1544 = vrot.lane.b32.xlu0 %v1522, 32
  %v1545 = vpop.permute.xlu0 %1544
  %1546 = vrot.lane.b32.xlu0 %v1521, 32
  %v1547 = vpop.permute.xlu0 %1546
  %1548 = vrot.lane.b32.xlu0 %v1525, 32
  %v1549 = vpop.permute.xlu0 %1548
  %1550 = vrot.lane.b32.xlu0 %v1524, 32
  %v1551 = vpop.permute.xlu0 %1550
  %1552 = vrot.lane.b32.xlu0 %v1528, 32
  %v1553 = vpop.permute.xlu0 %1552
  %1554 = vrot.lane.b32.xlu0 %v1527, 32
  %v1555 = vpop.permute.xlu0 %1554
  %1556 = vrot.lane.b32.xlu0 %v1531, 32
  %v1557 = vpop.permute.xlu0 %1556
  %1558 = vrot.lane.b32.xlu0 %v1530, 32
  %v1559 = vpop.permute.xlu0 %1558
  %1560 = vrot.lane.b32.xlu0 %v1534, 32
  %v1561 = vpop.permute.xlu0 %1560
  %1562 = vrot.lane.b32.xlu0 %v1533, 32
  %v1563 = vpop.permute.xlu0 %1562
  %1564 = vrot.lane.b32.xlu0 %v1537, 32
  %v1565 = vpop.permute.xlu0 %1564
  %1566 = vrot.lane.b32.xlu0 %v1536, 32
  %v1567 = vpop.permute.xlu0 %1566
  %1568 = vrot.lane.b32.xlu0 %v1540, 32
  %v1569 = vpop.permute.xlu0 %1568
  %1570 = vrot.lane.b32.xlu0 %v1539, 32
  %v1571 = vpop.permute.xlu0 %1570
  %1572 = vrot.lane.b32.xlu0 %v1543, 32
  %v1573 = vpop.permute.xlu0 %1572
  %1574 = vrot.lane.b32.xlu0 %v1542, 32
  %v1575 = vpop.permute.xlu0 %1574
  %v1592 = vadd.f32 %v1503, %v1545
  %v1593 = vadd.f32 %v1504, %v1547
  %v1594 = vadd.f32 %v1505, %v1549
  %v1595 = vadd.f32 %v1506, %v1551
  %v1596 = vadd.f32 %v1507, %v1553
  %v1597 = vadd.f32 %v1508, %v1555
  %v1598 = vadd.f32 %v1509, %v1557
  %v1599 = vadd.f32 %v1510, %v1559
  %v1600 = vadd.f32 %v1511, %v1561
  %v1601 = vadd.f32 %v1512, %v1563
  %v1602 = vadd.f32 %v1513, %v1565
  %v1603 = vadd.f32 %v1514, %v1567
  %v1604 = vadd.f32 %v1515, %v1569
  %v1605 = vadd.f32 %v1516, %v1571
  %v1606 = vadd.f32 %v1517, %v1573
  %v1607 = vadd.f32 %v1518, %v1575
  %v1608 = vld [vmem:[%s6] sm:$0x1]
  %v1610 = vlaneseq
  %v1611 = vshrl.u32 %v1610, 7
  %v1612 = vsub.s32 0, %v1611
  %v1613 = vrot.slane %v1608, %v1612
  %v1615 = vadd.f32 %v1592, %v1613
  %v1616 = vadd.f32 %v1593, %v1613
  %v1617 = vadd.f32 %v1594, %v1613
  %v1618 = vadd.f32 %v1595, %v1613
  %v1619 = vadd.f32 %v1596, %v1613
  %v1620 = vadd.f32 %v1597, %v1613
  %v1621 = vadd.f32 %v1598, %v1613
  %v1622 = vadd.f32 %v1599, %v1613
  %v1623 = vadd.f32 %v1600, %v1613
  %v1624 = vadd.f32 %v1601, %v1613
  %v1625 = vadd.f32 %v1602, %v1613
  %v1626 = vadd.f32 %v1603, %v1613
  %v1627 = vadd.f32 %v1604, %v1613
  %v1628 = vadd.f32 %v1605, %v1613
  %v1629 = vadd.f32 %v1606, %v1613
  %v1630 = vadd.f32 %v1607, %v1613
  %v1631 = vmax.f32 %v1615, 0.0
  %v1632 = vmax.f32 %v1616, 0.0
  %v1633 = vmax.f32 %v1617, 0.0
  %v1634 = vmax.f32 %v1618, 0.0
  %v1635 = vmax.f32 %v1619, 0.0
  %v1636 = vmax.f32 %v1620, 0.0
  %v1637 = vmax.f32 %v1621, 0.0
  %v1638 = vmax.f32 %v1622, 0.0
  %v1639 = vmax.f32 %v1623, 0.0
  %v1640 = vmax.f32 %v1624, 0.0
  %v1641 = vmax.f32 %v1625, 0.0
  %v1642 = vmax.f32 %v1626, 0.0
  %v1643 = vmax.f32 %v1627, 0.0
  %v1644 = vmax.f32 %v1628, 0.0
  %v1645 = vmax.f32 %v1629, 0.0
  %v1646 = vmax.f32 %v1630, 0.0
  %v1647 = vld [vmem:[%s7] sm:$0xff]
  %v1648 = vld [vmem:[%s7 + $0x8] sm:$0x3]
  %v1649 = vmul.f32 %v1631, %v1647
  %v1650 = vmul.f32 %v1632, %v1648
  %v1651 = vmul.f32 %v1633, %v1647
  %v1652 = vmul.f32 %v1634, %v1648
  %v1653 = vmul.f32 %v1635, %v1647
  %v1654 = vmul.f32 %v1636, %v1648
  %v1655 = vmul.f32 %v1637, %v1647
  %v1656 = vmul.f32 %v1638, %v1648
  %v1657 = vmul.f32 %v1639, %v1647
  %v1658 = vmul.f32 %v1640, %v1648
  %v1659 = vmul.f32 %v1641, %v1647
  %v1660 = vmul.f32 %v1642, %v1648
  %v1661 = vmul.f32 %v1643, %v1647
  %v1662 = vmul.f32 %v1644, %v1648
  %v1663 = vmul.f32 %v1645, %v1647
  %v1664 = vmul.f32 %v1646, %v1648
  %vm1665 = vcmask 195584
  %v1666 = vsel %vm1665, %v1649, -inf
  %vm1667 = vcmask 189440
  %v1668 = vsel %vm1667, %v1650, -inf
  %v1669 = vmax.f32 %v1666, %v1668
  %v1670 = vrot.slane %v1669, 4
  %v1671 = vmax.f32 %v1669, %v1670
  %v1672 = vrot.slane %v1671, 2
  %v1673 = vmax.f32 %v1671, %v1672
  %v1674 = vrot.slane %v1673, 1
  %v1675 = vmax.f32 %v1673, %v1674
  %v1676 = vsel %vm1665, %v1651, -inf
  %v1677 = vsel %vm1667, %v1652, -inf
  %v1678 = vmax.f32 %v1676, %v1677
  %v1679 = vrot.slane %v1678, 4
  %v1680 = vmax.f32 %v1678, %v1679
  %v1681 = vrot.slane %v1680, 2
  %v1682 = vmax.f32 %v1680, %v1681
  %v1683 = vrot.slane %v1682, 1
  %v1684 = vmax.f32 %v1682, %v1683
  %v1685 = vsel %vm1665, %v1653, -inf
  %v1686 = vsel %vm1667, %v1654, -inf
  %v1687 = vmax.f32 %v1685, %v1686
  %v1688 = vrot.slane %v1687, 4
  %v1689 = vmax.f32 %v1687, %v1688
  %v1690 = vrot.slane %v1689, 2
  %v1691 = vmax.f32 %v1689, %v1690
  %v1692 = vrot.slane %v1691, 1
  %v1693 = vmax.f32 %v1691, %v1692
  %v1694 = vsel %vm1665, %v1655, -inf
  %v1695 = vsel %vm1667, %v1656, -inf
  %v1696 = vmax.f32 %v1694, %v1695
  %v1697 = vrot.slane %v1696, 4
  %v1698 = vmax.f32 %v1696, %v1697
  %v1699 = vrot.slane %v1698, 2
  %v1700 = vmax.f32 %v1698, %v1699
  %v1701 = vrot.slane %v1700, 1
  %v1702 = vmax.f32 %v1700, %v1701
  %v1703 = vsel %vm1665, %v1657, -inf
  %v1704 = vsel %vm1667, %v1658, -inf
  %v1705 = vmax.f32 %v1703, %v1704
  %v1706 = vrot.slane %v1705, 4
  %v1707 = vmax.f32 %v1705, %v1706
  %v1708 = vrot.slane %v1707, 2
  %v1709 = vmax.f32 %v1707, %v1708
  %v1710 = vrot.slane %v1709, 1
  %v1711 = vmax.f32 %v1709, %v1710
  %v1712 = vsel %vm1665, %v1659, -inf
  %v1713 = vsel %vm1667, %v1660, -inf
  %v1714 = vmax.f32 %v1712, %v1713
  %v1715 = vrot.slane %v1714, 4
  %v1716 = vmax.f32 %v1714, %v1715
  %v1717 = vrot.slane %v1716, 2
  %v1718 = vmax.f32 %v1716, %v1717
  %v1719 = vrot.slane %v1718, 1
  %v1720 = vmax.f32 %v1718, %v1719
  %v1721 = vsel %vm1665, %v1661, -inf
  %v1722 = vsel %vm1667, %v1662, -inf
  %v1723 = vmax.f32 %v1721, %v1722
  %v1724 = vrot.slane %v1723, 4
  %v1725 = vmax.f32 %v1723, %v1724
  %v1726 = vrot.slane %v1725, 2
  %v1727 = vmax.f32 %v1725, %v1726
  %v1728 = vrot.slane %v1727, 1
  %v1729 = vmax.f32 %v1727, %v1728
  %v1730 = vsel %vm1665, %v1663, -inf
  %v1731 = vsel %vm1667, %v1664, -inf
  %v1732 = vmax.f32 %v1730, %v1731
  %v1733 = vrot.slane %v1732, 4
  %v1734 = vmax.f32 %v1732, %v1733
  %v1735 = vrot.slane %v1734, 2
  %v1736 = vmax.f32 %v1734, %v1735
  %v1737 = vrot.slane %v1736, 1
  %v1738 = vmax.f32 %v1736, %v1737
  %v1739 = vld [vmem:[%s8] sm:$0xff]
  %v1740 = vld [vmem:[%s8 + $0x8] sm:$0xff]
  %v1741 = vld [vmem:[%s8 + $0x10] sm:$0xff]
  %v1742 = vld [vmem:[%s9] sm:$0x1]
  %v1744 = vlaneseq
  %v1745 = vshrl.u32 %v1744, 7
  %v1746 = vsub.s32 0, %v1745
  %v1747 = vrot.slane %v1742, %v1746
  %v1757 = vsel %vm924, %v1684, %v1675
  %v1758 = vsel %vm926, %v1693, %v1757
  %v1759 = vsel %vm928, %v1702, %v1758
  %v1760 = vsel %vm930, %v1711, %v1759
  %v1761 = vsel %vm932, %v1720, %v1760
  %v1762 = vsel %vm934, %v1729, %v1761
  %v1763 = vsel %vm936, %v1738, %v1762
  %v1764 = vsel %vm1665, %v1763, 0
  %1766 = vmatprep.subr.mxu0 0.0
  %1767 = vmatpush1.msra.mxu0 %v1739
  %1768 = vmatprep.subr.mxu0 0.0
  %1769 = vmatpush1.msra.mxu0 %v1740
  %1770 = vmatprep.subr.mxu0 0.0
  %1771 = vmatpush1.msra.mxu0 %v1741
  %1772 = vmatprep.subr.mxu0 0.0
  %1773 = vmatpush1.msra.mxu0 0.0
  %1774 = vmatprep.subr.mxu0 0.0
  %1775 = vmatpush1.msra.mxu0 0.0
  %1776 = vmatprep.subr.mxu0 0.0
  %1777 = vmatpush1.msra.mxu0 0.0
  %1778 = vmatprep.subr.mxu0 0.0
  %1779 = vmatpush1.msra.mxu0 0.0
  %1780 = vmatprep.subr.mxu0 0.0
  %1781 = vmatpush1.msra.mxu0 0.0
  %1782 = vmatprep.subr.mxu0 0.0
  %1783 = vmatpush1.msra.mxu0 0.0
  %1784 = vmatprep.subr.mxu0 0.0
  %1785 = vmatpush1.msra.mxu0 0.0
  %1786 = vmatprep.subr.mxu0 0.0
  %1787 = vmatpush1.msra.mxu0 0.0
  %1788 = vmatprep.subr.mxu0 0.0
  %1789 = vmatpush1.msra.mxu0 0.0
  %1790 = vmatprep.subr.mxu0 0.0
  %1791 = vmatpush1.msra.mxu0 0.0
  %1792 = vmatprep.subr.mxu0 0.0
  %1793 = vmatpush1.msra.mxu0 0.0
  %1794 = vmatprep.subr.mxu0 0.0
  %1795 = vmatpush1.msra.mxu0 0.0
  %1796 = vmatprep.subr.mxu0 0.0
  %1797 = vmatpush1.msra.mxu0 0.0
  %1798 = vmatprep.subr.mxu0 0.0
  %1799 = vmatpush1.msra.mxu0 0.0
  %1800 = vmatprep.subr.mxu0 0.0
  %1801 = vmatpush1.msra.mxu0 0.0
  %1802 = vmatprep.subr.mxu0 0.0
  %1803 = vmatpush1.msra.mxu0 0.0
  %1804 = vmatprep.subr.mxu0 0.0
  %1805 = vmatpush1.msra.mxu0 0.0
  %1806 = vmatprep.subr.mxu0 0.0
  %1807 = vmatpush1.msra.mxu0 0.0
  %1808 = vmatprep.subr.mxu0 0.0
  %1809 = vmatpush1.msra.mxu0 0.0
  %1810 = vmatprep.subr.mxu0 0.0
  %1811 = vmatpush1.msra.mxu0 0.0
  %1812 = vmatprep.subr.mxu0 0.0
  %1813 = vmatpush1.msra.mxu0 0.0
  %1814 = vmatprep.subr.mxu0 0.0
  %1815 = vmatpush1.msra.mxu0 0.0
  %1816 = vmatprep.subr.mxu0 0.0
  %1817 = vmatpush1.msra.mxu0 0.0
  %1818 = vmatprep.subr.mxu0 0.0
  %1819 = vmatpush1.msra.mxu0 0.0
  %1820 = vmatprep.subr.mxu0 0.0
  %1821 = vmatpush1.msra.mxu0 0.0
  %1822 = vmatprep.subr.mxu0 0.0
  %1823 = vmatpush1.msra.mxu0 0.0
  %1824 = vmatprep.subr.mxu0 0.0
  %1825 = vmatpush1.msra.mxu0 0.0
  %1826 = vmatprep.subr.mxu0 0.0
  %1827 = vmatpush1.msra.mxu0 0.0
  %1828 = vmatprep.subr.mxu0 0.0
  %1829 = vmatpush1.msra.mxu0 0.0
  %1830 = vmatprep.mubr.f32.mxu0 0.0
  %1831 = vmatmul.mubr.f32.gmra.mrb[0].mxu0 %v1764
  %v1832 = vpop.f32.mrb[0].mxu0
  %v1833 = vadd.f32 %v1747, %v1832
  %v1834 = vpop.f32.mrb[0].mxu0
  %1835 = vdwg.mxu0
  %vm1836 = vcmask 15360
  %1837 = vst.msk [vmem:[%s10] sm:$0xff] %vm1836, %v1833
  // Predicated region
  $region42: #{vmask_cnn_forward.1} parent=0 // pred_check
    _
  $region43: #{vmask_cnn_forward.1} parent=0 // pred_check_branch
    %1839 = sbr.rel (0) target = $region45
  $region44: #{vmask_cnn_forward.1} parent=0 // pred_region
    _
  $region45: #{vmask_cnn_forward.1} parent=0 // pred_fallthru
    _
  // Predicated region
  $region46: #{vmask_cnn_forward.1} parent=0 // pred_check
    _
  $region47: #{vmask_cnn_forward.1} parent=0 // pred_check_branch
    %1841 = sbr.rel (0) target = $region49
  $region48: #{vmask_cnn_forward.1} parent=0 // pred_region
    _
  $region49: #{vmask_cnn_forward.1} parent=0 // pred_fallthru
    _
  // Predicated region
  $region50: #{vmask_cnn_forward.1} parent=0 // pred_check
    _
  $region51: #{vmask_cnn_forward.1} parent=0 // pred_check_branch
    %1843 = sbr.rel (0) target = $region53
  $region52: #{vmask_cnn_forward.1} parent=0 // pred_region
    _
  $region53: #{vmask_cnn_forward.1} parent=0 // pred_fallthru
    _
  // Predicated region
  $region54: #{vmask_cnn_forward.1} parent=0 // pred_check
    _
  $region55: #{vmask_cnn_forward.1} parent=0 // pred_check_branch
    %1845 = sbr.rel (0) target = $region57
  $region56: #{vmask_cnn_forward.1} parent=0 // pred_region
    _
  $region57: #{vmask_cnn_forward.1} parent=0 // pred_fallthru
    _

</llo_original>
